<compile_context>
chip_gen: v7x
topology: tpu7x:2x2x1
jax: 0.10.0
libtpu: 0.0.40
codegen_flags: <defaults>
</compile_context>

<pallas_src>
import functools

import jax
import jax.numpy as jnp
from jax.experimental import pallas as pl
from jax.experimental.pallas import tpu as pltpu

D_IN = 3 * 32 * 32   # 3072
LANE = 128           # TPU lane width; 64/10-wide layers zero-padded to this
N_OUT = 10
DIMS = [(D_IN, 128), (128, 128), (128, 64), (64, 64), (64, 10)]


def _mlp3_kernel(x_ref,
                 w1_ref, b1_ref,
                 w2_ref, b2_ref,
                 w3_ref, b3_ref,
                 w4_ref, b4_ref,
                 w5_ref, b5_ref,
                 o_ref,
                 *, fc1_bf16):
    """Fused 5-layer MLP on one (TB, 3072) batch tile.  ReLU after fc1..fc4.

    All hidden/output widths are 128 lanes (narrow layers zero-padded in the
    wrapper), so intermediates are lane-dense and the final store is an
    unmasked full-vreg store.
    """
    h = x_ref[...]
    if fc1_bf16 and h.dtype != jnp.bfloat16:
        # In-kernel cast: x stays f32 in HBM (single read, no wrapper copy),
        # but the K=3072 fc1 matmul runs with bf16 operands on the MXU
        # (f32 accumulation via preferred_element_type).
        h = h.astype(jnp.bfloat16)

    h = jnp.dot(h, w1_ref[...], preferred_element_type=jnp.float32) + b1_ref[...]
    h = jnp.maximum(h, 0.0)                                     # (TB, 128)

    h = jnp.dot(h, w2_ref[...], preferred_element_type=jnp.float32) + b2_ref[...]
    h = jnp.maximum(h, 0.0)                                     # (TB, 128)

    h = jnp.dot(h, w3_ref[...], preferred_element_type=jnp.float32) + b3_ref[...]
    h = jnp.maximum(h, 0.0)                                     # (TB, 128) (cols 64: are 0)

    h = jnp.dot(h, w4_ref[...], preferred_element_type=jnp.float32) + b4_ref[...]
    h = jnp.maximum(h, 0.0)                                     # (TB, 128) (cols 64: are 0)

    o_ref[...] = (jnp.dot(h, w5_ref[...], preferred_element_type=jnp.float32)
                  + b5_ref[...])                                # (TB, 128) (cols 10: are 0)


def _round_up(n, m):
    return ((n + m - 1) // m) * m


def _pad2d(a, rows, cols):
    r, c = a.shape
    return jnp.pad(a, ((0, rows - r), (0, cols - c)))


def _choose_batch_tile(B, max_tile):
    """Batch tile: multiple of 8, >=2 (even #) tiles when B>=16 (v7x megacore),
    capped at max_tile, sized so ragged-tail waste stays small."""
    if B <= 8:
        return B                               # single whole-array block
    B8 = _round_up(B, 8)
    tb = max(8, (min(max_tile, B8) // 8) * 8)
    if B8 >= 16:
        tb = min(tb, _round_up((B8 + 1) // 2, 8))   # at least 2 tiles
    k = -(-B8 // tb)
    if k > 1 and (k % 2):
        k += 1                                 # even tile count -> no idle TC
    return max(8, _round_up(-(-B8 // k), 8))


@functools.partial(
    jax.jit, static_argnames=("batch_tile", "fc1_bf16", "vmem_limit_bytes"))
def mlp3_forward(x, params, *, batch_tile=1024, fc1_bf16=True,
                 vmem_limit_bytes=48 * 1024 * 1024):
    """x: (B, 3, 32, 32) or (B, 3072), f32 or bf16. Returns (logits (B,10), None)."""
    B = x.shape[0]
    x2d = x.reshape(B, -1)                     # row-major flatten, free under jit
    assert x2d.shape[1] == D_IN
    if x2d.dtype not in (jnp.float32, jnp.bfloat16):
        x2d = x2d.astype(jnp.float32)
    # Deliberately NOT casting f32 x -> bf16 here: that would add a full
    # read+write HBM pass over x.  The cast happens inside the kernel.

    TB = _choose_batch_tile(B, batch_tile)
    n_tiles = pl.cdiv(B, TB)                   # ragged tail handled by the grid

    # --- zero-pad narrow layers to 128 lanes (numerically exact) ---
    (w1, b1), (w2, b2), (w3, b3), (w4, b4), (w5, b5) = params
    fc1_w_dtype = jnp.bfloat16 if fc1_bf16 else jnp.float32
    w1p, b1p = w1.astype(fc1_w_dtype), _pad2d(b1, 1, LANE).astype(jnp.float32)
    w2p, b2p = w2.astype(jnp.float32), _pad2d(b2, 1, LANE).astype(jnp.float32)
    w3p, b3p = _pad2d(w3, LANE, LANE).astype(jnp.float32), _pad2d(b3, 1, LANE).astype(jnp.float32)
    w4p, b4p = _pad2d(w4, LANE, LANE).astype(jnp.float32), _pad2d(b4, 1, LANE).astype(jnp.float32)
    w5p, b5p = _pad2d(w5, LANE, LANE).astype(jnp.float32), _pad2d(b5, 1, LANE).astype(jnp.float32)
    weights = (w1p, b1p, w2p, b2p, w3p, b3p, w4p, b4p, w5p, b5p)

    # x / output tiled over the batch; weights get constant index maps so they
    # are fetched once and stay VMEM-resident across all grid steps.
    # TODO(synk): mark weight specs single-buffered (pipeline_mode=pl.Buffered(1))
    # once verified Mosaic doesn't already elide the second buffer (~1.2 MiB).
    x_spec = pl.BlockSpec((TB, D_IN), lambda i: (i, 0))
    w_specs = [pl.BlockSpec(w.shape, lambda i: (0, 0)) for w in weights]
    out_spec = pl.BlockSpec((TB, LANE), lambda i: (i, 0))

    weight_bytes = sum(int(w.size) * w.dtype.itemsize for w in weights)
    x_bytes = int(x2d.size) * x2d.dtype.itemsize
    flops = 2 * B * (D_IN * 128 + 4 * 128 * 128)
    cost = pl.CostEstimate(
        flops=flops,
        transcendentals=0,
        bytes_accessed=x_bytes + weight_bytes + B * LANE * 4,
    )

    out = pl.pallas_call(
        functools.partial(_mlp3_kernel, fc1_bf16=fc1_bf16),
        out_shape=jax.ShapeDtypeStruct((B, LANE), jnp.float32),
        grid_spec=pltpu.PrefetchScalarGridSpec(
            num_scalar_prefetch=0,
            grid=(n_tiles,),
            in_specs=[x_spec] + w_specs,
            out_specs=out_spec,
        ),
        compiler_params=pltpu.CompilerParams(
            dimension_semantics=("parallel",),   # megacore-shard batch tiles (v7x)
            vmem_limit_bytes=vmem_limit_bytes,   # above 16/32 MiB scoped defaults
        ),
        cost_estimate=cost,
    )(x2d, *weights)

    return out[:, :N_OUT], None


def mlp3_reference(x, params):
    """Plain-JAX f32 reference matching the PyTorch forward."""
    h = x.reshape(x.shape[0], -1).astype(jnp.float32)
    for i, (w, b) in enumerate(params):
        h = h @ w + b
        if i < 4:
            h = jnp.maximum(h, 0.0)
    return h


def init_linear_params(key, fan_in, fan_out):
    """Matches nn.Linear default uniform(-1/sqrt(fan_in), 1/sqrt(fan_in)).
    Weight kept in (in, out) layout so the kernel does x @ W."""
    bound = 1.0 / (fan_in ** 0.5)
    kw, kb = jax.random.split(key)
    w = jax.random.uniform(kw, (fan_in, fan_out), jnp.float32, -bound, bound)
    b = jax.random.uniform(kb, (1, fan_out), jnp.float32, -bound, bound)
    return w, b


def init_mlp3_params(key):
    keys = jax.random.split(key, len(DIMS))
    return tuple(init_linear_params(k, fi, fo) for k, (fi, fo) in zip(keys, DIMS))


if __name__ == "__main__":
    root = jax.random.PRNGKey(0)
    k_x1, k_x2, k_p = jax.random.split(root, 3)
    params = init_mlp3_params(k_p)

    # Case 1: tiny batch, exact-f32 path, single whole-array block.
    x1 = jax.random.normal(k_x1, (2, 3, 32, 32), dtype=jnp.float32)  # NCHW like torch
    y1, aux = mlp3_forward(x1, params, fc1_bf16=False)
    y1 = jax.block_until_ready(y1)
    assert y1.shape == (2, N_OUT) and y1.dtype == jnp.float32 and aux is None
    assert jnp.allclose(y1, mlp3_reference(x1, params), atol=1e-4, rtol=1e-4)

    # Case 2: multi-tile grid + ragged tail + default bf16-fc1 path
    # (50 rows, tile 16 -> 4 tiles, last tile clamped to 2 valid rows).
    x2 = jax.random.normal(k_x2, (50, 3, 32, 32), dtype=jnp.float32)
    y2, _ = mlp3_forward(x2, params, batch_tile=16)
    y2 = jax.block_until_ready(y2)
    assert y2.shape == (50, N_OUT) and y2.dtype == jnp.float32
    # bf16 fc1 operands (f32 accumulate): not bit-exact vs f32 reference.
    assert jnp.allclose(y2, mlp3_reference(x2, params), atol=5e-2, rtol=5e-2)

    print("KERNEL_OK")
</pallas_src>

<mosaic_0001>
module attributes {stable_mosaic.version = 11 : i64} {
  func.func @_mlp3_kernel(%arg0: i32, %arg1: memref<2x3072xf32, #tpu.memory_space<vmem>>, %arg2: memref<3072x128xf32, #tpu.memory_space<vmem>>, %arg3: memref<1x128xf32, #tpu.memory_space<vmem>>, %arg4: memref<128x128xf32, #tpu.memory_space<vmem>>, %arg5: memref<1x128xf32, #tpu.memory_space<vmem>>, %arg6: memref<128x128xf32, #tpu.memory_space<vmem>>, %arg7: memref<1x128xf32, #tpu.memory_space<vmem>>, %arg8: memref<128x128xf32, #tpu.memory_space<vmem>>, %arg9: memref<1x128xf32, #tpu.memory_space<vmem>>, %arg10: memref<128x128xf32, #tpu.memory_space<vmem>>, %arg11: memref<1x128xf32, #tpu.memory_space<vmem>>, %arg12: memref<2x128xf32, #tpu.memory_space<vmem>>) attributes {dimension_semantics = [#tpu.dimension_semantics<parallel>], iteration_bounds = array<i64: 1>, scalar_prefetch = 0 : i64, scratch_operands = 0 : i64, tpu.core_type = #tpu.core_type<tc>, window_params = [{transform_indices = @transform_0, window_bounds = array<i64: 2, 3072>}, {pipeline_mode = #tpu.pipeline_mode<synchronous>, transform_indices = @transform_1, window_bounds = array<i64: 3072, 128>}, {pipeline_mode = #tpu.pipeline_mode<synchronous>, transform_indices = @transform_2, window_bounds = array<i64: 1, 128>}, {pipeline_mode = #tpu.pipeline_mode<synchronous>, transform_indices = @transform_3, window_bounds = array<i64: 128, 128>}, {pipeline_mode = #tpu.pipeline_mode<synchronous>, transform_indices = @transform_4, window_bounds = array<i64: 1, 128>}, {pipeline_mode = #tpu.pipeline_mode<synchronous>, transform_indices = @transform_5, window_bounds = array<i64: 128, 128>}, {pipeline_mode = #tpu.pipeline_mode<synchronous>, transform_indices = @transform_6, window_bounds = array<i64: 1, 128>}, {pipeline_mode = #tpu.pipeline_mode<synchronous>, transform_indices = @transform_7, window_bounds = array<i64: 128, 128>}, {pipeline_mode = #tpu.pipeline_mode<synchronous>, transform_indices = @transform_8, window_bounds = array<i64: 1, 128>}, {pipeline_mode = #tpu.pipeline_mode<synchronous>, transform_indices = @transform_9, window_bounds = array<i64: 128, 128>}, {pipeline_mode = #tpu.pipeline_mode<synchronous>, transform_indices = @transform_10, window_bounds = array<i64: 1, 128>}, {transform_indices = @transform_11, window_bounds = array<i64: 2, 128>}]} {
    %c0 = arith.constant 0 : index
    %c0_0 = arith.constant 0 : index
    %0 = vector.load %arg1[%c0, %c0_0] : memref<2x3072xf32, #tpu.memory_space<vmem>>, vector<2x3072xf32>
    %c0_1 = arith.constant 0 : index
    %c0_2 = arith.constant 0 : index
    %1 = vector.load %arg2[%c0_1, %c0_2] : memref<3072x128xf32, #tpu.memory_space<vmem>>, vector<3072x128xf32>
    %cst = arith.constant dense<0.000000e+00> : vector<2x128xf32>
    %2 = tpu.matmul %0, %1, %cst {dimension_numbers = #tpu.dot_dimension_numbers<[1], [0], [0], [1], [0, 0, 1, 1], [], []>} : vector<2x3072xf32>, vector<3072x128xf32>, vector<2x128xf32> -> vector<2x128xf32>
    %c0_3 = arith.constant 0 : index
    %c0_4 = arith.constant 0 : index
    %3 = vector.load %arg3[%c0_3, %c0_4] : memref<1x128xf32, #tpu.memory_space<vmem>>, vector<1x128xf32>
    %4 = vector.broadcast %3 : vector<1x128xf32> to vector<2x128xf32>
    %5 = arith.addf %2, %4 : vector<2x128xf32>
    %cst_5 = arith.constant 0.000000e+00 : f32
    %6 = vector.broadcast %cst_5 : f32 to vector<2x128xf32>
    %7 = arith.maximumf %5, %6 : vector<2x128xf32>
    %c0_6 = arith.constant 0 : index
    %c0_7 = arith.constant 0 : index
    %8 = vector.load %arg4[%c0_6, %c0_7] : memref<128x128xf32, #tpu.memory_space<vmem>>, vector<128x128xf32>
    %cst_8 = arith.constant dense<0.000000e+00> : vector<2x128xf32>
    %9 = tpu.matmul %7, %8, %cst_8 {dimension_numbers = #tpu.dot_dimension_numbers<[1], [0], [0], [1], [0, 0, 1, 1], [], []>} : vector<2x128xf32>, vector<128x128xf32>, vector<2x128xf32> -> vector<2x128xf32>
    %c0_9 = arith.constant 0 : index
    %c0_10 = arith.constant 0 : index
    %10 = vector.load %arg5[%c0_9, %c0_10] : memref<1x128xf32, #tpu.memory_space<vmem>>, vector<1x128xf32>
    %11 = vector.broadcast %10 : vector<1x128xf32> to vector<2x128xf32>
    %12 = arith.addf %9, %11 : vector<2x128xf32>
    %cst_11 = arith.constant 0.000000e+00 : f32
    %13 = vector.broadcast %cst_11 : f32 to vector<2x128xf32>
    %14 = arith.maximumf %12, %13 : vector<2x128xf32>
    %c0_12 = arith.constant 0 : index
    %c0_13 = arith.constant 0 : index
    %15 = vector.load %arg6[%c0_12, %c0_13] : memref<128x128xf32, #tpu.memory_space<vmem>>, vector<128x128xf32>
    %cst_14 = arith.constant dense<0.000000e+00> : vector<2x128xf32>
    %16 = tpu.matmul %14, %15, %cst_14 {dimension_numbers = #tpu.dot_dimension_numbers<[1], [0], [0], [1], [0, 0, 1, 1], [], []>} : vector<2x128xf32>, vector<128x128xf32>, vector<2x128xf32> -> vector<2x128xf32>
    %c0_15 = arith.constant 0 : index
    %c0_16 = arith.constant 0 : index
    %17 = vector.load %arg7[%c0_15, %c0_16] : memref<1x128xf32, #tpu.memory_space<vmem>>, vector<1x128xf32>
    %18 = vector.broadcast %17 : vector<1x128xf32> to vector<2x128xf32>
    %19 = arith.addf %16, %18 : vector<2x128xf32>
    %cst_17 = arith.constant 0.000000e+00 : f32
    %20 = vector.broadcast %cst_17 : f32 to vector<2x128xf32>
    %21 = arith.maximumf %19, %20 : vector<2x128xf32>
    %c0_18 = arith.constant 0 : index
    %c0_19 = arith.constant 0 : index
    %22 = vector.load %arg8[%c0_18, %c0_19] : memref<128x128xf32, #tpu.memory_space<vmem>>, vector<128x128xf32>
    %cst_20 = arith.constant dense<0.000000e+00> : vector<2x128xf32>
    %23 = tpu.matmul %21, %22, %cst_20 {dimension_numbers = #tpu.dot_dimension_numbers<[1], [0], [0], [1], [0, 0, 1, 1], [], []>} : vector<2x128xf32>, vector<128x128xf32>, vector<2x128xf32> -> vector<2x128xf32>
    %c0_21 = arith.constant 0 : index
    %c0_22 = arith.constant 0 : index
    %24 = vector.load %arg9[%c0_21, %c0_22] : memref<1x128xf32, #tpu.memory_space<vmem>>, vector<1x128xf32>
    %25 = vector.broadcast %24 : vector<1x128xf32> to vector<2x128xf32>
    %26 = arith.addf %23, %25 : vector<2x128xf32>
    %cst_23 = arith.constant 0.000000e+00 : f32
    %27 = vector.broadcast %cst_23 : f32 to vector<2x128xf32>
    %28 = arith.maximumf %26, %27 : vector<2x128xf32>
    %c0_24 = arith.constant 0 : index
    %c0_25 = arith.constant 0 : index
    %29 = vector.load %arg10[%c0_24, %c0_25] : memref<128x128xf32, #tpu.memory_space<vmem>>, vector<128x128xf32>
    %cst_26 = arith.constant dense<0.000000e+00> : vector<2x128xf32>
    %30 = tpu.matmul %28, %29, %cst_26 {dimension_numbers = #tpu.dot_dimension_numbers<[1], [0], [0], [1], [0, 0, 1, 1], [], []>} : vector<2x128xf32>, vector<128x128xf32>, vector<2x128xf32> -> vector<2x128xf32>
    %c0_27 = arith.constant 0 : index
    %c0_28 = arith.constant 0 : index
    %31 = vector.load %arg11[%c0_27, %c0_28] : memref<1x128xf32, #tpu.memory_space<vmem>>, vector<1x128xf32>
    %32 = vector.broadcast %31 : vector<1x128xf32> to vector<2x128xf32>
    %33 = arith.addf %30, %32 : vector<2x128xf32>
    %c0_29 = arith.constant 0 : index
    %c0_30 = arith.constant 0 : index
    %34 = vector.load %arg12[%c0_29, %c0_30] : memref<2x128xf32, #tpu.memory_space<vmem>>, vector<2x128xf32>
    tpu.vector_store %arg12[%c0_29, %c0_30], %33 {strides = array<i32>} : memref<2x128xf32, #tpu.memory_space<vmem>>, vector<2x128xf32>,
    return
  }
  func.func @transform_0(%arg0: i32) -> (i32, i32) {
    %c0_i32 = arith.constant 0 : i32
    %c0_i32_0 = arith.constant 0 : i32
    return %arg0, %c0_i32 : i32, i32
  }
  func.func @transform_1(%arg0: i32) -> (i32, i32) {
    %c0_i32 = arith.constant 0 : i32
    %c0_i32_0 = arith.constant 0 : i32
    %c0_i32_1 = arith.constant 0 : i32
    return %c0_i32, %c0_i32_0 : i32, i32
  }
  func.func @transform_2(%arg0: i32) -> (i32, i32) {
    %c0_i32 = arith.constant 0 : i32
    %c0_i32_0 = arith.constant 0 : i32
    %c0_i32_1 = arith.constant 0 : i32
    return %c0_i32, %c0_i32_0 : i32, i32
  }
  func.func @transform_3(%arg0: i32) -> (i32, i32) {
    %c0_i32 = arith.constant 0 : i32
    %c0_i32_0 = arith.constant 0 : i32
    %c0_i32_1 = arith.constant 0 : i32
    return %c0_i32, %c0_i32_0 : i32, i32
  }
  func.func @transform_4(%arg0: i32) -> (i32, i32) {
    %c0_i32 = arith.constant 0 : i32
    %c0_i32_0 = arith.constant 0 : i32
    %c0_i32_1 = arith.constant 0 : i32
    return %c0_i32, %c0_i32_0 : i32, i32
  }
  func.func @transform_5(%arg0: i32) -> (i32, i32) {
    %c0_i32 = arith.constant 0 : i32
    %c0_i32_0 = arith.constant 0 : i32
    %c0_i32_1 = arith.constant 0 : i32
    return %c0_i32, %c0_i32_0 : i32, i32
  }
  func.func @transform_6(%arg0: i32) -> (i32, i32) {
    %c0_i32 = arith.constant 0 : i32
    %c0_i32_0 = arith.constant 0 : i32
    %c0_i32_1 = arith.constant 0 : i32
    return %c0_i32, %c0_i32_0 : i32, i32
  }
  func.func @transform_7(%arg0: i32) -> (i32, i32) {
    %c0_i32 = arith.constant 0 : i32
    %c0_i32_0 = arith.constant 0 : i32
    %c0_i32_1 = arith.constant 0 : i32
    return %c0_i32, %c0_i32_0 : i32, i32
  }
  func.func @transform_8(%arg0: i32) -> (i32, i32) {
    %c0_i32 = arith.constant 0 : i32
    %c0_i32_0 = arith.constant 0 : i32
    %c0_i32_1 = arith.constant 0 : i32
    return %c0_i32, %c0_i32_0 : i32, i32
  }
  func.func @transform_9(%arg0: i32) -> (i32, i32) {
    %c0_i32 = arith.constant 0 : i32
    %c0_i32_0 = arith.constant 0 : i32
    %c0_i32_1 = arith.constant 0 : i32
    return %c0_i32, %c0_i32_0 : i32, i32
  }
  func.func @transform_10(%arg0: i32) -> (i32, i32) {
    %c0_i32 = arith.constant 0 : i32
    %c0_i32_0 = arith.constant 0 : i32
    %c0_i32_1 = arith.constant 0 : i32
    return %c0_i32, %c0_i32_0 : i32, i32
  }
  func.func @transform_11(%arg0: i32) -> (i32, i32) {
    %c0_i32 = arith.constant 0 : i32
    %c0_i32_0 = arith.constant 0 : i32
    return %arg0, %c0_i32 : i32, i32
  }
}

</mosaic_0001>

<llo_original>
// kernel: mlp3_forward.1
$region0: #{mlp3_forward.1}
  #allocation0 [shape = 'u32[]', space=smem, size = 0x4, offset = 0x4, fixed_abs, tag = 'smem constant byte address 0x4 - core index']
  #allocation1 [shape = 'u32[144,128]{1,0:T(1,128)}', space=vmem, size = 0x12000, scoped, tag = 'internal scratch']
  %s0 = inlined_call_operand.vmem [shape: f32[2,3072], index: 0, kind: input, shape index: {}]
  %s1 = inlined_call_operand.hbm [shape: f32[3072,128], index: 1, kind: input, shape index: {}]
  %s2 = inlined_call_operand.hbm [shape: f32[1,128], index: 2, kind: input, shape index: {}]
  %s3 = inlined_call_operand.hbm [shape: f32[128,128], index: 3, kind: input, shape index: {}]
  %s4 = inlined_call_operand.hbm [shape: f32[1,128], index: 4, kind: input, shape index: {}]
  %s5 = inlined_call_operand.vmem [shape: f32[128,128], index: 5, kind: input, shape index: {}]
  %s6 = inlined_call_operand.vmem [shape: f32[1,128], index: 6, kind: input, shape index: {}]
  %s7 = inlined_call_operand.vmem [shape: f32[128,128], index: 7, kind: input, shape index: {}]
  %s8 = inlined_call_operand.vmem [shape: f32[1,128], index: 8, kind: input, shape index: {}]
  %s9 = inlined_call_operand.vmem [shape: f32[128,128], index: 9, kind: input, shape index: {}]
  %s10 = inlined_call_operand.vmem [shape: f32[1,128], index: 10, kind: input, shape index: {}]
  %s11 = inlined_call_operand.hbm [shape: f32[2,128], index: 11, kind: output, shape index: {}]
  %s12 = sld [smem:[#allocation0]]
  $region70: #{mlp3_forward.1} parent=0
    _
  %s14 = ssub.s32 1, %s12
  %s15 = scalar_select 0, %s14, %s12
  $region1: #{mlp3_forward.1} parent=0
    #allocation2 [shape = 'u8[1572864]{0}', space=vmem, size = 0x180000, scoped, tag = 'input window, operand 1, single buffered']
    #allocation3 [shape = 's32[1]{0}', space=sflag, size = 0x4, scoped, tag = 'scoped memory for mlp3_forward.1']
    #allocation4 [shape = 's32[1]{0}', space=sflag, size = 0x4, scoped, tag = 'scoped memory for mlp3_forward.1']
    #allocation5 [shape = 'u8[512]{0}', space=vmem, size = 0x400, scoped, tag = 'input window, operand 2, single buffered']
    #allocation6 [shape = 's32[1]{0}', space=sflag, size = 0x4, scoped, tag = 'scoped memory for mlp3_forward.1']
    #allocation7 [shape = 'u8[65536]{0}', space=vmem, size = 0x10000, scoped, tag = 'input window, operand 3, single buffered']
    #allocation8 [shape = 'u8[512]{0}', space=vmem, size = 0x400, scoped, tag = 'input window, operand 4, single buffered']
    #allocation9 [shape = 's32[1]{0}', space=sflag, size = 0x4, scoped, tag = 'scoped memory for mlp3_forward.1']
    #allocation10 [shape = 'u8[1024]{0}', space=vmem, size = 0x400, scoped, tag = 'output window, operand 0, single buffered']
    %16 = vsyncpa [#allocation3], 0
    %17 = vsyncpa [#allocation6], 0
    %18 = vsyncpa [#allocation9], 0
    %19 = vsyncpa [#allocation4], 0
    // Predicated region
    $region2: #{mlp3_forward.1} parent=1 // pred_check
      _
    $region3: #{mlp3_forward.1} parent=1 // pred_check_branch
      %21 = sbr.rel (0) target = $region5
    $region4: #{mlp3_forward.1} parent=1 // pred_region
      _
    $region5: #{mlp3_forward.1} parent=1 // pred_fallthru
      _
    // Predicated region
    $region6: #{mlp3_forward.1} parent=1 // pred_check
      _
    $region7: #{mlp3_forward.1} parent=1 // pred_check_branch
      %23 = sbr.rel (0) target = $region9
    $region8: #{mlp3_forward.1} parent=1 // pred_region
      %s25 = ssub.s32 49152, 49152
      %26 = vsyncadd [#allocation3], %s25
      %s27 = sshll.u32 [#allocation2], 4
      %s28 = int_to_ptr.vmem [resolvable:$true] %s27
      %33 = dma.hbm_to_vmem [thread:$0]  %s1, 49152, %s28, [#allocation3], 128, 128, 8
    $region9: #{mlp3_forward.1} parent=1 // pred_fallthru
      _
    // Predicated region
    $region10: #{mlp3_forward.1} parent=1 // pred_check
      _
    $region11: #{mlp3_forward.1} parent=1 // pred_check_branch
      %35 = sbr.rel (0) target = $region13
    $region12: #{mlp3_forward.1} parent=1 // pred_region
      %s37 = ssub.s32 16, 16
      %38 = vsyncadd [#allocation6], %s37
      %s40 = sshll.u32 [#allocation5], 4
      %s41 = int_to_ptr.vmem [resolvable:$true] %s40
      %43 = dma.hbm_to_vmem [thread:$0]  %s2, 16, %s41, [#allocation6]
    $region13: #{mlp3_forward.1} parent=1 // pred_fallthru
      _
    // Predicated region
    $region14: #{mlp3_forward.1} parent=1 // pred_check
      _
    $region15: #{mlp3_forward.1} parent=1 // pred_check_branch
      %45 = sbr.rel (0) target = $region17
    $region16: #{mlp3_forward.1} parent=1 // pred_region
      %s47 = ssub.s32 2048, 2048
      %48 = vsyncadd [#allocation6], %s47
      %s49 = sshll.u32 [#allocation7], 4
      %s50 = int_to_ptr.vmem [resolvable:$true] %s49
      %55 = dma.hbm_to_vmem [thread:$0]  %s3, 2048, %s50, [#allocation6], 128, 128, 8
    $region17: #{mlp3_forward.1} parent=1 // pred_fallthru
      _
    // Predicated region
    $region18: #{mlp3_forward.1} parent=1 // pred_check
      _
    $region19: #{mlp3_forward.1} parent=1 // pred_check_branch
      %57 = sbr.rel (0) target = $region21
    $region20: #{mlp3_forward.1} parent=1 // pred_region
      %s59 = ssub.s32 16, 16
      %60 = vsyncadd [#allocation9], %s59
      %s62 = sshll.u32 [#allocation8], 4
      %s63 = int_to_ptr.vmem [resolvable:$true] %s62
      %65 = dma.hbm_to_vmem [thread:$0]  %s4, 16, %s63, [#allocation9]
    $region21: #{mlp3_forward.1} parent=1 // pred_fallthru
      _
    // Predicated region
    $region22: #{mlp3_forward.1} parent=1 // pred_check
      _
    $region23: #{mlp3_forward.1} parent=1 // pred_check_branch
      %67 = sbr.rel (0) target = $region25
    $region24: #{mlp3_forward.1} parent=1 // pred_region
      _
    $region25: #{mlp3_forward.1} parent=1 // pred_fallthru
      _
    // Predicated region
    $region26: #{mlp3_forward.1} parent=1 // pred_check
      _
    $region27: #{mlp3_forward.1} parent=1 // pred_check_branch
      %69 = sbr.rel (0) target = $region29
    $region28: #{mlp3_forward.1} parent=1 // pred_region
      _
    $region29: #{mlp3_forward.1} parent=1 // pred_fallthru
      _
    // Predicated region
    $region30: #{mlp3_forward.1} parent=1 // pred_check
      _
    $region31: #{mlp3_forward.1} parent=1 // pred_check_branch
      %71 = sbr.rel (0) target = $region33
    $region32: #{mlp3_forward.1} parent=1 // pred_region
      _
    $region33: #{mlp3_forward.1} parent=1 // pred_fallthru
      _
    // Predicated region
    $region34: #{mlp3_forward.1} parent=1 // pred_check
      _
    $region35: #{mlp3_forward.1} parent=1 // pred_check_branch
      %73 = sbr.rel (0) target = $region37
    $region36: #{mlp3_forward.1} parent=1 // pred_region
      _
    $region37: #{mlp3_forward.1} parent=1 // pred_fallthru
      _
    // Predicated region
    $region38: #{mlp3_forward.1} parent=1 // pred_check
      _
    $region39: #{mlp3_forward.1} parent=1 // pred_check_branch
      %75 = sbr.rel (0) target = $region41
    $region40: #{mlp3_forward.1} parent=1 // pred_region
      _
    $region41: #{mlp3_forward.1} parent=1 // pred_fallthru
      _
    // Predicated region
    $region42: #{mlp3_forward.1} parent=1 // pred_check
      _
    $region43: #{mlp3_forward.1} parent=1 // pred_check_branch
      %77 = sbr.rel (0) target = $region45
    $region44: #{mlp3_forward.1} parent=1 // pred_region
      _
    $region45: #{mlp3_forward.1} parent=1 // pred_fallthru
      _
    // Predicated region
    $region46: #{mlp3_forward.1} parent=1 // pred_check
      _
    $region47: #{mlp3_forward.1} parent=1 // pred_check_branch
      %79 = sbr.rel (0) target = $region49
    $region48: #{mlp3_forward.1} parent=1 // pred_region
      %80 = dma.done [#allocation3], 49152
    $region49: #{mlp3_forward.1} parent=1 // pred_fallthru
      _
    // Predicated region
    $region50: #{mlp3_forward.1} parent=1 // pred_check
      _
    $region51: #{mlp3_forward.1} parent=1 // pred_check_branch
      %82 = sbr.rel (0) target = $region53
    $region52: #{mlp3_forward.1} parent=1 // pred_region
      %83 = dma.done [#allocation6], 16
    $region53: #{mlp3_forward.1} parent=1 // pred_fallthru
      _
    // Predicated region
    $region54: #{mlp3_forward.1} parent=1 // pred_check
      _
    $region55: #{mlp3_forward.1} parent=1 // pred_check_branch
      %85 = sbr.rel (0) target = $region57
    $region56: #{mlp3_forward.1} parent=1 // pred_region
      %86 = dma.done [#allocation6], 2048
    $region57: #{mlp3_forward.1} parent=1 // pred_fallthru
      _
    // Predicated region
    $region58: #{mlp3_forward.1} parent=1 // pred_check
      _
    $region59: #{mlp3_forward.1} parent=1 // pred_check_branch
      %88 = sbr.rel (0) target = $region61
    $region60: #{mlp3_forward.1} parent=1 // pred_region
      %89 = dma.done [#allocation9], 16
    $region61: #{mlp3_forward.1} parent=1 // pred_fallthru
      _
    %v90 = vld [vmem:[%s0] sm:$0xff]
    %v91 = vld [vmem:[%s0 + $0x8] sm:$0xff]
    %v92 = vld [vmem:[%s0 + $0x10] sm:$0xff]
    %v93 = vld [vmem:[%s0 + $0x18] sm:$0xff]
    %v94 = vld [vmem:[%s0 + $0x20] sm:$0xff]
    %v95 = vld [vmem:[%s0 + $0x28] sm:$0xff]
    %v96 = vld [vmem:[#allocation2] sm:$0xff]
    %v97 = vld [vmem:[#allocation2 + $0x8] sm:$0xff]
    %v98 = vld [vmem:[#allocation2 + $0x10] sm:$0xff]
    %v99 = vld [vmem:[#allocation2 + $0x18] sm:$0xff]
    %v100 = vld [vmem:[#allocation2 + $0x20] sm:$0xff]
    %v101 = vld [vmem:[#allocation2 + $0x28] sm:$0xff]
    %v102 = vld [vmem:[#allocation2 + $0x30] sm:$0xff]
    %v103 = vld [vmem:[#allocation2 + $0x38] sm:$0xff]
    %v104 = vld [vmem:[#allocation2 + $0x40] sm:$0xff]
    %v105 = vld [vmem:[#allocation2 + $0x48] sm:$0xff]
    %v106 = vld [vmem:[#allocation2 + $0x50] sm:$0xff]
    %v107 = vld [vmem:[#allocation2 + $0x58] sm:$0xff]
    %v108 = vld [vmem:[#allocation2 + $0x60] sm:$0xff]
    %v109 = vld [vmem:[#allocation2 + $0x68] sm:$0xff]
    %v110 = vld [vmem:[#allocation2 + $0x70] sm:$0xff]
    %v111 = vld [vmem:[#allocation2 + $0x78] sm:$0xff]
    %v112 = vld [vmem:[#allocation2 + $0x80] sm:$0xff]
    %v113 = vld [vmem:[#allocation2 + $0x88] sm:$0xff]
    %v114 = vld [vmem:[#allocation2 + $0x90] sm:$0xff]
    %v115 = vld [vmem:[#allocation2 + $0x98] sm:$0xff]
    %v116 = vld [vmem:[#allocation2 + $0xa0] sm:$0xff]
    %v117 = vld [vmem:[#allocation2 + $0xa8] sm:$0xff]
    %v118 = vld [vmem:[#allocation2 + $0xb0] sm:$0xff]
    %v119 = vld [vmem:[#allocation2 + $0xb8] sm:$0xff]
    %v120 = vld [vmem:[#allocation2 + $0xc0] sm:$0xff]
    %v121 = vld [vmem:[#allocation2 + $0xc8] sm:$0xff]
    %v122 = vld [vmem:[#allocation2 + $0xd0] sm:$0xff]
    %v123 = vld [vmem:[#allocation2 + $0xd8] sm:$0xff]
    %v124 = vld [vmem:[#allocation2 + $0xe0] sm:$0xff]
    %v125 = vld [vmem:[#allocation2 + $0xe8] sm:$0xff]
    %v126 = vld [vmem:[#allocation2 + $0xf0] sm:$0xff]
    %v127 = vld [vmem:[#allocation2 + $0xf8] sm:$0xff]
    %v128 = vld [vmem:[#allocation2 + $0x100] sm:$0xff]
    %v129 = vld [vmem:[#allocation2 + $0x108] sm:$0xff]
    %v130 = vld [vmem:[#allocation2 + $0x110] sm:$0xff]
    %v131 = vld [vmem:[#allocation2 + $0x118] sm:$0xff]
    %v132 = vld [vmem:[#allocation2 + $0x120] sm:$0xff]
    %v133 = vld [vmem:[#allocation2 + $0x128] sm:$0xff]
    %v134 = vld [vmem:[#allocation2 + $0x130] sm:$0xff]
    %v135 = vld [vmem:[#allocation2 + $0x138] sm:$0xff]
    %v136 = vld [vmem:[#allocation2 + $0x140] sm:$0xff]
    %v137 = vld [vmem:[#allocation2 + $0x148] sm:$0xff]
    %v138 = vld [vmem:[#allocation2 + $0x150] sm:$0xff]
    %v139 = vld [vmem:[#allocation2 + $0x158] sm:$0xff]
    %v140 = vld [vmem:[#allocation2 + $0x160] sm:$0xff]
    %v141 = vld [vmem:[#allocation2 + $0x168] sm:$0xff]
    %v142 = vld [vmem:[#allocation2 + $0x170] sm:$0xff]
    %v143 = vld [vmem:[#allocation2 + $0x178] sm:$0xff]
    %v144 = vld [vmem:[#allocation2 + $0x180] sm:$0xff]
    %v145 = vld [vmem:[#allocation2 + $0x188] sm:$0xff]
    %v146 = vld [vmem:[#allocation2 + $0x190] sm:$0xff]
    %v147 = vld [vmem:[#allocation2 + $0x198] sm:$0xff]
    %v148 = vld [vmem:[#allocation2 + $0x1a0] sm:$0xff]
    %v149 = vld [vmem:[#allocation2 + $0x1a8] sm:$0xff]
    %v150 = vld [vmem:[#allocation2 + $0x1b0] sm:$0xff]
    %v151 = vld [vmem:[#allocation2 + $0x1b8] sm:$0xff]
    %v152 = vld [vmem:[#allocation2 + $0x1c0] sm:$0xff]
    %v153 = vld [vmem:[#allocation2 + $0x1c8] sm:$0xff]
    %v154 = vld [vmem:[#allocation2 + $0x1d0] sm:$0xff]
    %v155 = vld [vmem:[#allocation2 + $0x1d8] sm:$0xff]
    %v156 = vld [vmem:[#allocation2 + $0x1e0] sm:$0xff]
    %v157 = vld [vmem:[#allocation2 + $0x1e8] sm:$0xff]
    %v158 = vld [vmem:[#allocation2 + $0x1f0] sm:$0xff]
    %v159 = vld [vmem:[#allocation2 + $0x1f8] sm:$0xff]
    %v160 = vld [vmem:[#allocation2 + $0x200] sm:$0xff]
    %v161 = vld [vmem:[#allocation2 + $0x208] sm:$0xff]
    %v162 = vld [vmem:[#allocation2 + $0x210] sm:$0xff]
    %v163 = vld [vmem:[#allocation2 + $0x218] sm:$0xff]
    %v164 = vld [vmem:[#allocation2 + $0x220] sm:$0xff]
    %v165 = vld [vmem:[#allocation2 + $0x228] sm:$0xff]
    %v166 = vld [vmem:[#allocation2 + $0x230] sm:$0xff]
    %v167 = vld [vmem:[#allocation2 + $0x238] sm:$0xff]
    %v168 = vld [vmem:[#allocation2 + $0x240] sm:$0xff]
    %v169 = vld [vmem:[#allocation2 + $0x248] sm:$0xff]
    %v170 = vld [vmem:[#allocation2 + $0x250] sm:$0xff]
    %v171 = vld [vmem:[#allocation2 + $0x258] sm:$0xff]
    %v172 = vld [vmem:[#allocation2 + $0x260] sm:$0xff]
    %v173 = vld [vmem:[#allocation2 + $0x268] sm:$0xff]
    %v174 = vld [vmem:[#allocation2 + $0x270] sm:$0xff]
    %v175 = vld [vmem:[#allocation2 + $0x278] sm:$0xff]
    %v176 = vld [vmem:[#allocation2 + $0x280] sm:$0xff]
    %v177 = vld [vmem:[#allocation2 + $0x288] sm:$0xff]
    %v178 = vld [vmem:[#allocation2 + $0x290] sm:$0xff]
    %v179 = vld [vmem:[#allocation2 + $0x298] sm:$0xff]
    %v180 = vld [vmem:[#allocation2 + $0x2a0] sm:$0xff]
    %v181 = vld [vmem:[#allocation2 + $0x2a8] sm:$0xff]
    %v182 = vld [vmem:[#allocation2 + $0x2b0] sm:$0xff]
    %v183 = vld [vmem:[#allocation2 + $0x2b8] sm:$0xff]
    %v184 = vld [vmem:[#allocation2 + $0x2c0] sm:$0xff]
    %v185 = vld [vmem:[#allocation2 + $0x2c8] sm:$0xff]
    %v186 = vld [vmem:[#allocation2 + $0x2d0] sm:$0xff]
    %v187 = vld [vmem:[#allocation2 + $0x2d8] sm:$0xff]
    %v188 = vld [vmem:[#allocation2 + $0x2e0] sm:$0xff]
    %v189 = vld [vmem:[#allocation2 + $0x2e8] sm:$0xff]
    %v190 = vld [vmem:[#allocation2 + $0x2f0] sm:$0xff]
    %v191 = vld [vmem:[#allocation2 + $0x2f8] sm:$0xff]
    %v192 = vld [vmem:[#allocation2 + $0x300] sm:$0xff]
    %v193 = vld [vmem:[#allocation2 + $0x308] sm:$0xff]
    %v194 = vld [vmem:[#allocation2 + $0x310] sm:$0xff]
    %v195 = vld [vmem:[#allocation2 + $0x318] sm:$0xff]
    %v196 = vld [vmem:[#allocation2 + $0x320] sm:$0xff]
    %v197 = vld [vmem:[#allocation2 + $0x328] sm:$0xff]
    %v198 = vld [vmem:[#allocation2 + $0x330] sm:$0xff]
    %v199 = vld [vmem:[#allocation2 + $0x338] sm:$0xff]
    %v200 = vld [vmem:[#allocation2 + $0x340] sm:$0xff]
    %v201 = vld [vmem:[#allocation2 + $0x348] sm:$0xff]
    %v202 = vld [vmem:[#allocation2 + $0x350] sm:$0xff]
    %v203 = vld [vmem:[#allocation2 + $0x358] sm:$0xff]
    %v204 = vld [vmem:[#allocation2 + $0x360] sm:$0xff]
    %v205 = vld [vmem:[#allocation2 + $0x368] sm:$0xff]
    %v206 = vld [vmem:[#allocation2 + $0x370] sm:$0xff]
    %v207 = vld [vmem:[#allocation2 + $0x378] sm:$0xff]
    %v208 = vld [vmem:[#allocation2 + $0x380] sm:$0xff]
    %v209 = vld [vmem:[#allocation2 + $0x388] sm:$0xff]
    %v210 = vld [vmem:[#allocation2 + $0x390] sm:$0xff]
    %v211 = vld [vmem:[#allocation2 + $0x398] sm:$0xff]
    %v212 = vld [vmem:[#allocation2 + $0x3a0] sm:$0xff]
    %v213 = vld [vmem:[#allocation2 + $0x3a8] sm:$0xff]
    %v214 = vld [vmem:[#allocation2 + $0x3b0] sm:$0xff]
    %v215 = vld [vmem:[#allocation2 + $0x3b8] sm:$0xff]
    %v216 = vld [vmem:[#allocation2 + $0x3c0] sm:$0xff]
    %v217 = vld [vmem:[#allocation2 + $0x3c8] sm:$0xff]
    %v218 = vld [vmem:[#allocation2 + $0x3d0] sm:$0xff]
    %v219 = vld [vmem:[#allocation2 + $0x3d8] sm:$0xff]
    %v220 = vld [vmem:[#allocation2 + $0x3e0] sm:$0xff]
    %v221 = vld [vmem:[#allocation2 + $0x3e8] sm:$0xff]
    %v222 = vld [vmem:[#allocation2 + $0x3f0] sm:$0xff]
    %v223 = vld [vmem:[#allocation2 + $0x3f8] sm:$0xff]
    %v224 = vld [vmem:[#allocation2 + $0x400] sm:$0xff]
    %v225 = vld [vmem:[#allocation2 + $0x408] sm:$0xff]
    %v226 = vld [vmem:[#allocation2 + $0x410] sm:$0xff]
    %v227 = vld [vmem:[#allocation2 + $0x418] sm:$0xff]
    %v228 = vld [vmem:[#allocation2 + $0x420] sm:$0xff]
    %v229 = vld [vmem:[#allocation2 + $0x428] sm:$0xff]
    %v230 = vld [vmem:[#allocation2 + $0x430] sm:$0xff]
    %v231 = vld [vmem:[#allocation2 + $0x438] sm:$0xff]
    %v232 = vld [vmem:[#allocation2 + $0x440] sm:$0xff]
    %v233 = vld [vmem:[#allocation2 + $0x448] sm:$0xff]
    %v234 = vld [vmem:[#allocation2 + $0x450] sm:$0xff]
    %v235 = vld [vmem:[#allocation2 + $0x458] sm:$0xff]
    %v236 = vld [vmem:[#allocation2 + $0x460] sm:$0xff]
    %v237 = vld [vmem:[#allocation2 + $0x468] sm:$0xff]
    %v238 = vld [vmem:[#allocation2 + $0x470] sm:$0xff]
    %v239 = vld [vmem:[#allocation2 + $0x478] sm:$0xff]
    %v240 = vld [vmem:[#allocation2 + $0x480] sm:$0xff]
    %v241 = vld [vmem:[#allocation2 + $0x488] sm:$0xff]
    %v242 = vld [vmem:[#allocation2 + $0x490] sm:$0xff]
    %v243 = vld [vmem:[#allocation2 + $0x498] sm:$0xff]
    %v244 = vld [vmem:[#allocation2 + $0x4a0] sm:$0xff]
    %v245 = vld [vmem:[#allocation2 + $0x4a8] sm:$0xff]
    %v246 = vld [vmem:[#allocation2 + $0x4b0] sm:$0xff]
    %v247 = vld [vmem:[#allocation2 + $0x4b8] sm:$0xff]
    %v248 = vld [vmem:[#allocation2 + $0x4c0] sm:$0xff]
    %v249 = vld [vmem:[#allocation2 + $0x4c8] sm:$0xff]
    %v250 = vld [vmem:[#allocation2 + $0x4d0] sm:$0xff]
    %v251 = vld [vmem:[#allocation2 + $0x4d8] sm:$0xff]
    %v252 = vld [vmem:[#allocation2 + $0x4e0] sm:$0xff]
    %v253 = vld [vmem:[#allocation2 + $0x4e8] sm:$0xff]
    %v254 = vld [vmem:[#allocation2 + $0x4f0] sm:$0xff]
    %v255 = vld [vmem:[#allocation2 + $0x4f8] sm:$0xff]
    %v256 = vld [vmem:[#allocation2 + $0x500] sm:$0xff]
    %v257 = vld [vmem:[#allocation2 + $0x508] sm:$0xff]
    %v258 = vld [vmem:[#allocation2 + $0x510] sm:$0xff]
    %v259 = vld [vmem:[#allocation2 + $0x518] sm:$0xff]
    %v260 = vld [vmem:[#allocation2 + $0x520] sm:$0xff]
    %v261 = vld [vmem:[#allocation2 + $0x528] sm:$0xff]
    %v262 = vld [vmem:[#allocation2 + $0x530] sm:$0xff]
    %v263 = vld [vmem:[#allocation2 + $0x538] sm:$0xff]
    %v264 = vld [vmem:[#allocation2 + $0x540] sm:$0xff]
    %v265 = vld [vmem:[#allocation2 + $0x548] sm:$0xff]
    %v266 = vld [vmem:[#allocation2 + $0x550] sm:$0xff]
    %v267 = vld [vmem:[#allocation2 + $0x558] sm:$0xff]
    %v268 = vld [vmem:[#allocation2 + $0x560] sm:$0xff]
    %v269 = vld [vmem:[#allocation2 + $0x568] sm:$0xff]
    %v270 = vld [vmem:[#allocation2 + $0x570] sm:$0xff]
    %v271 = vld [vmem:[#allocation2 + $0x578] sm:$0xff]
    %v272 = vld [vmem:[#allocation2 + $0x580] sm:$0xff]
    %v273 = vld [vmem:[#allocation2 + $0x588] sm:$0xff]
    %v274 = vld [vmem:[#allocation2 + $0x590] sm:$0xff]
    %v275 = vld [vmem:[#allocation2 + $0x598] sm:$0xff]
    %v276 = vld [vmem:[#allocation2 + $0x5a0] sm:$0xff]
    %v277 = vld [vmem:[#allocation2 + $0x5a8] sm:$0xff]
    %v278 = vld [vmem:[#allocation2 + $0x5b0] sm:$0xff]
    %v279 = vld [vmem:[#allocation2 + $0x5b8] sm:$0xff]
    %v280 = vld [vmem:[#allocation2 + $0x5c0] sm:$0xff]
    %v281 = vld [vmem:[#allocation2 + $0x5c8] sm:$0xff]
    %v282 = vld [vmem:[#allocation2 + $0x5d0] sm:$0xff]
    %v283 = vld [vmem:[#allocation2 + $0x5d8] sm:$0xff]
    %v284 = vld [vmem:[#allocation2 + $0x5e0] sm:$0xff]
    %v285 = vld [vmem:[#allocation2 + $0x5e8] sm:$0xff]
    %v286 = vld [vmem:[#allocation2 + $0x5f0] sm:$0xff]
    %v287 = vld [vmem:[#allocation2 + $0x5f8] sm:$0xff]
    %v288 = vld [vmem:[#allocation2 + $0x600] sm:$0xff]
    %v289 = vld [vmem:[#allocation2 + $0x608] sm:$0xff]
    %v290 = vld [vmem:[#allocation2 + $0x610] sm:$0xff]
    %v291 = vld [vmem:[#allocation2 + $0x618] sm:$0xff]
    %v292 = vld [vmem:[#allocation2 + $0x620] sm:$0xff]
    %v293 = vld [vmem:[#allocation2 + $0x628] sm:$0xff]
    %v294 = vld [vmem:[#allocation2 + $0x630] sm:$0xff]
    %v295 = vld [vmem:[#allocation2 + $0x638] sm:$0xff]
    %v296 = vld [vmem:[#allocation2 + $0x640] sm:$0xff]
    %v297 = vld [vmem:[#allocation2 + $0x648] sm:$0xff]
    %v298 = vld [vmem:[#allocation2 + $0x650] sm:$0xff]
    %v299 = vld [vmem:[#allocation2 + $0x658] sm:$0xff]
    %v300 = vld [vmem:[#allocation2 + $0x660] sm:$0xff]
    %v301 = vld [vmem:[#allocation2 + $0x668] sm:$0xff]
    %v302 = vld [vmem:[#allocation2 + $0x670] sm:$0xff]
    %v303 = vld [vmem:[#allocation2 + $0x678] sm:$0xff]
    %v304 = vld [vmem:[#allocation2 + $0x680] sm:$0xff]
    %v305 = vld [vmem:[#allocation2 + $0x688] sm:$0xff]
    %v306 = vld [vmem:[#allocation2 + $0x690] sm:$0xff]
    %v307 = vld [vmem:[#allocation2 + $0x698] sm:$0xff]
    %v308 = vld [vmem:[#allocation2 + $0x6a0] sm:$0xff]
    %v309 = vld [vmem:[#allocation2 + $0x6a8] sm:$0xff]
    %v310 = vld [vmem:[#allocation2 + $0x6b0] sm:$0xff]
    %v311 = vld [vmem:[#allocation2 + $0x6b8] sm:$0xff]
    %v312 = vld [vmem:[#allocation2 + $0x6c0] sm:$0xff]
    %v313 = vld [vmem:[#allocation2 + $0x6c8] sm:$0xff]
    %v314 = vld [vmem:[#allocation2 + $0x6d0] sm:$0xff]
    %v315 = vld [vmem:[#allocation2 + $0x6d8] sm:$0xff]
    %v316 = vld [vmem:[#allocation2 + $0x6e0] sm:$0xff]
    %v317 = vld [vmem:[#allocation2 + $0x6e8] sm:$0xff]
    %v318 = vld [vmem:[#allocation2 + $0x6f0] sm:$0xff]
    %v319 = vld [vmem:[#allocation2 + $0x6f8] sm:$0xff]
    %v320 = vld [vmem:[#allocation2 + $0x700] sm:$0xff]
    %v321 = vld [vmem:[#allocation2 + $0x708] sm:$0xff]
    %v322 = vld [vmem:[#allocation2 + $0x710] sm:$0xff]
    %v323 = vld [vmem:[#allocation2 + $0x718] sm:$0xff]
    %v324 = vld [vmem:[#allocation2 + $0x720] sm:$0xff]
    %v325 = vld [vmem:[#allocation2 + $0x728] sm:$0xff]
    %v326 = vld [vmem:[#allocation2 + $0x730] sm:$0xff]
    %v327 = vld [vmem:[#allocation2 + $0x738] sm:$0xff]
    %v328 = vld [vmem:[#allocation2 + $0x740] sm:$0xff]
    %v329 = vld [vmem:[#allocation2 + $0x748] sm:$0xff]
    %v330 = vld [vmem:[#allocation2 + $0x750] sm:$0xff]
    %v331 = vld [vmem:[#allocation2 + $0x758] sm:$0xff]
    %v332 = vld [vmem:[#allocation2 + $0x760] sm:$0xff]
    %v333 = vld [vmem:[#allocation2 + $0x768] sm:$0xff]
    %v334 = vld [vmem:[#allocation2 + $0x770] sm:$0xff]
    %v335 = vld [vmem:[#allocation2 + $0x778] sm:$0xff]
    %v336 = vld [vmem:[#allocation2 + $0x780] sm:$0xff]
    %v337 = vld [vmem:[#allocation2 + $0x788] sm:$0xff]
    %v338 = vld [vmem:[#allocation2 + $0x790] sm:$0xff]
    %v339 = vld [vmem:[#allocation2 + $0x798] sm:$0xff]
    %v340 = vld [vmem:[#allocation2 + $0x7a0] sm:$0xff]
    %v341 = vld [vmem:[#allocation2 + $0x7a8] sm:$0xff]
    %v342 = vld [vmem:[#allocation2 + $0x7b0] sm:$0xff]
    %v343 = vld [vmem:[#allocation2 + $0x7b8] sm:$0xff]
    %v344 = vld [vmem:[#allocation2 + $0x7c0] sm:$0xff]
    %v345 = vld [vmem:[#allocation2 + $0x7c8] sm:$0xff]
    %v346 = vld [vmem:[#allocation2 + $0x7d0] sm:$0xff]
    %v347 = vld [vmem:[#allocation2 + $0x7d8] sm:$0xff]
    %v348 = vld [vmem:[#allocation2 + $0x7e0] sm:$0xff]
    %v349 = vld [vmem:[#allocation2 + $0x7e8] sm:$0xff]
    %v350 = vld [vmem:[#allocation2 + $0x7f0] sm:$0xff]
    %v351 = vld [vmem:[#allocation2 + $0x7f8] sm:$0xff]
    %v352 = vld [vmem:[#allocation2 + $0x800] sm:$0xff]
    %v353 = vld [vmem:[#allocation2 + $0x808] sm:$0xff]
    %v354 = vld [vmem:[#allocation2 + $0x810] sm:$0xff]
    %v355 = vld [vmem:[#allocation2 + $0x818] sm:$0xff]
    %v356 = vld [vmem:[#allocation2 + $0x820] sm:$0xff]
    %v357 = vld [vmem:[#allocation2 + $0x828] sm:$0xff]
    %v358 = vld [vmem:[#allocation2 + $0x830] sm:$0xff]
    %v359 = vld [vmem:[#allocation2 + $0x838] sm:$0xff]
    %v360 = vld [vmem:[#allocation2 + $0x840] sm:$0xff]
    %v361 = vld [vmem:[#allocation2 + $0x848] sm:$0xff]
    %v362 = vld [vmem:[#allocation2 + $0x850] sm:$0xff]
    %v363 = vld [vmem:[#allocation2 + $0x858] sm:$0xff]
    %v364 = vld [vmem:[#allocation2 + $0x860] sm:$0xff]
    %v365 = vld [vmem:[#allocation2 + $0x868] sm:$0xff]
    %v366 = vld [vmem:[#allocation2 + $0x870] sm:$0xff]
    %v367 = vld [vmem:[#allocation2 + $0x878] sm:$0xff]
    %v368 = vld [vmem:[#allocation2 + $0x880] sm:$0xff]
    %v369 = vld [vmem:[#allocation2 + $0x888] sm:$0xff]
    %v370 = vld [vmem:[#allocation2 + $0x890] sm:$0xff]
    %v371 = vld [vmem:[#allocation2 + $0x898] sm:$0xff]
    %v372 = vld [vmem:[#allocation2 + $0x8a0] sm:$0xff]
    %v373 = vld [vmem:[#allocation2 + $0x8a8] sm:$0xff]
    %v374 = vld [vmem:[#allocation2 + $0x8b0] sm:$0xff]
    %v375 = vld [vmem:[#allocation2 + $0x8b8] sm:$0xff]
    %v376 = vld [vmem:[#allocation2 + $0x8c0] sm:$0xff]
    %v377 = vld [vmem:[#allocation2 + $0x8c8] sm:$0xff]
    %v378 = vld [vmem:[#allocation2 + $0x8d0] sm:$0xff]
    %v379 = vld [vmem:[#allocation2 + $0x8d8] sm:$0xff]
    %v380 = vld [vmem:[#allocation2 + $0x8e0] sm:$0xff]
    %v381 = vld [vmem:[#allocation2 + $0x8e8] sm:$0xff]
    %v382 = vld [vmem:[#allocation2 + $0x8f0] sm:$0xff]
    %v383 = vld [vmem:[#allocation2 + $0x8f8] sm:$0xff]
    %v384 = vld [vmem:[#allocation2 + $0x900] sm:$0xff]
    %v385 = vld [vmem:[#allocation2 + $0x908] sm:$0xff]
    %v386 = vld [vmem:[#allocation2 + $0x910] sm:$0xff]
    %v387 = vld [vmem:[#allocation2 + $0x918] sm:$0xff]
    %v388 = vld [vmem:[#allocation2 + $0x920] sm:$0xff]
    %v389 = vld [vmem:[#allocation2 + $0x928] sm:$0xff]
    %v390 = vld [vmem:[#allocation2 + $0x930] sm:$0xff]
    %v391 = vld [vmem:[#allocation2 + $0x938] sm:$0xff]
    %v392 = vld [vmem:[#allocation2 + $0x940] sm:$0xff]
    %v393 = vld [vmem:[#allocation2 + $0x948] sm:$0xff]
    %v394 = vld [vmem:[#allocation2 + $0x950] sm:$0xff]
    %v395 = vld [vmem:[#allocation2 + $0x958] sm:$0xff]
    %v396 = vld [vmem:[#allocation2 + $0x960] sm:$0xff]
    %v397 = vld [vmem:[#allocation2 + $0x968] sm:$0xff]
    %v398 = vld [vmem:[#allocation2 + $0x970] sm:$0xff]
    %v399 = vld [vmem:[#allocation2 + $0x978] sm:$0xff]
    %v400 = vld [vmem:[#allocation2 + $0x980] sm:$0xff]
    %v401 = vld [vmem:[#allocation2 + $0x988] sm:$0xff]
    %v402 = vld [vmem:[#allocation2 + $0x990] sm:$0xff]
    %v403 = vld [vmem:[#allocation2 + $0x998] sm:$0xff]
    %v404 = vld [vmem:[#allocation2 + $0x9a0] sm:$0xff]
    %v405 = vld [vmem:[#allocation2 + $0x9a8] sm:$0xff]
    %v406 = vld [vmem:[#allocation2 + $0x9b0] sm:$0xff]
    %v407 = vld [vmem:[#allocation2 + $0x9b8] sm:$0xff]
    %v408 = vld [vmem:[#allocation2 + $0x9c0] sm:$0xff]
    %v409 = vld [vmem:[#allocation2 + $0x9c8] sm:$0xff]
    %v410 = vld [vmem:[#allocation2 + $0x9d0] sm:$0xff]
    %v411 = vld [vmem:[#allocation2 + $0x9d8] sm:$0xff]
    %v412 = vld [vmem:[#allocation2 + $0x9e0] sm:$0xff]
    %v413 = vld [vmem:[#allocation2 + $0x9e8] sm:$0xff]
    %v414 = vld [vmem:[#allocation2 + $0x9f0] sm:$0xff]
    %v415 = vld [vmem:[#allocation2 + $0x9f8] sm:$0xff]
    %v416 = vld [vmem:[#allocation2 + $0xa00] sm:$0xff]
    %v417 = vld [vmem:[#allocation2 + $0xa08] sm:$0xff]
    %v418 = vld [vmem:[#allocation2 + $0xa10] sm:$0xff]
    %v419 = vld [vmem:[#allocation2 + $0xa18] sm:$0xff]
    %v420 = vld [vmem:[#allocation2 + $0xa20] sm:$0xff]
    %v421 = vld [vmem:[#allocation2 + $0xa28] sm:$0xff]
    %v422 = vld [vmem:[#allocation2 + $0xa30] sm:$0xff]
    %v423 = vld [vmem:[#allocation2 + $0xa38] sm:$0xff]
    %v424 = vld [vmem:[#allocation2 + $0xa40] sm:$0xff]
    %v425 = vld [vmem:[#allocation2 + $0xa48] sm:$0xff]
    %v426 = vld [vmem:[#allocation2 + $0xa50] sm:$0xff]
    %v427 = vld [vmem:[#allocation2 + $0xa58] sm:$0xff]
    %v428 = vld [vmem:[#allocation2 + $0xa60] sm:$0xff]
    %v429 = vld [vmem:[#allocation2 + $0xa68] sm:$0xff]
    %v430 = vld [vmem:[#allocation2 + $0xa70] sm:$0xff]
    %v431 = vld [vmem:[#allocation2 + $0xa78] sm:$0xff]
    %v432 = vld [vmem:[#allocation2 + $0xa80] sm:$0xff]
    %v433 = vld [vmem:[#allocation2 + $0xa88] sm:$0xff]
    %v434 = vld [vmem:[#allocation2 + $0xa90] sm:$0xff]
    %v435 = vld [vmem:[#allocation2 + $0xa98] sm:$0xff]
    %v436 = vld [vmem:[#allocation2 + $0xaa0] sm:$0xff]
    %v437 = vld [vmem:[#allocation2 + $0xaa8] sm:$0xff]
    %v438 = vld [vmem:[#allocation2 + $0xab0] sm:$0xff]
    %v439 = vld [vmem:[#allocation2 + $0xab8] sm:$0xff]
    %v440 = vld [vmem:[#allocation2 + $0xac0] sm:$0xff]
    %v441 = vld [vmem:[#allocation2 + $0xac8] sm:$0xff]
    %v442 = vld [vmem:[#allocation2 + $0xad0] sm:$0xff]
    %v443 = vld [vmem:[#allocation2 + $0xad8] sm:$0xff]
    %v444 = vld [vmem:[#allocation2 + $0xae0] sm:$0xff]
    %v445 = vld [vmem:[#allocation2 + $0xae8] sm:$0xff]
    %v446 = vld [vmem:[#allocation2 + $0xaf0] sm:$0xff]
    %v447 = vld [vmem:[#allocation2 + $0xaf8] sm:$0xff]
    %v448 = vld [vmem:[#allocation2 + $0xb00] sm:$0xff]
    %v449 = vld [vmem:[#allocation2 + $0xb08] sm:$0xff]
    %v450 = vld [vmem:[#allocation2 + $0xb10] sm:$0xff]
    %v451 = vld [vmem:[#allocation2 + $0xb18] sm:$0xff]
    %v452 = vld [vmem:[#allocation2 + $0xb20] sm:$0xff]
    %v453 = vld [vmem:[#allocation2 + $0xb28] sm:$0xff]
    %v454 = vld [vmem:[#allocation2 + $0xb30] sm:$0xff]
    %v455 = vld [vmem:[#allocation2 + $0xb38] sm:$0xff]
    %v456 = vld [vmem:[#allocation2 + $0xb40] sm:$0xff]
    %v457 = vld [vmem:[#allocation2 + $0xb48] sm:$0xff]
    %v458 = vld [vmem:[#allocation2 + $0xb50] sm:$0xff]
    %v459 = vld [vmem:[#allocation2 + $0xb58] sm:$0xff]
    %v460 = vld [vmem:[#allocation2 + $0xb60] sm:$0xff]
    %v461 = vld [vmem:[#allocation2 + $0xb68] sm:$0xff]
    %v462 = vld [vmem:[#allocation2 + $0xb70] sm:$0xff]
    %v463 = vld [vmem:[#allocation2 + $0xb78] sm:$0xff]
    %v464 = vld [vmem:[#allocation2 + $0xb80] sm:$0xff]
    %v465 = vld [vmem:[#allocation2 + $0xb88] sm:$0xff]
    %v466 = vld [vmem:[#allocation2 + $0xb90] sm:$0xff]
    %v467 = vld [vmem:[#allocation2 + $0xb98] sm:$0xff]
    %v468 = vld [vmem:[#allocation2 + $0xba0] sm:$0xff]
    %v469 = vld [vmem:[#allocation2 + $0xba8] sm:$0xff]
    %v470 = vld [vmem:[#allocation2 + $0xbb0] sm:$0xff]
    %v471 = vld [vmem:[#allocation2 + $0xbb8] sm:$0xff]
    %v472 = vld [vmem:[#allocation2 + $0xbc0] sm:$0xff]
    %v473 = vld [vmem:[#allocation2 + $0xbc8] sm:$0xff]
    %v474 = vld [vmem:[#allocation2 + $0xbd0] sm:$0xff]
    %v475 = vld [vmem:[#allocation2 + $0xbd8] sm:$0xff]
    %v476 = vld [vmem:[#allocation2 + $0xbe0] sm:$0xff]
    %v477 = vld [vmem:[#allocation2 + $0xbe8] sm:$0xff]
    %v478 = vld [vmem:[#allocation2 + $0xbf0] sm:$0xff]
    %v479 = vld [vmem:[#allocation2 + $0xbf8] sm:$0xff]
    %v480 = vld [vmem:[#allocation5] sm:$0x1]
    %v482 = vlaneseq
    %v483 = vshrl.u32 %v482, 7
    %v484 = vsub.s32 0, %v483
    %v485 = vrot.slane %v480, %v484
    %v493 = vcombine.high %v90, %v90
    %v495 = vunpack.c.l.s4 1983009808
    %v496 = vunpack.c.0.s8 %v495
    %v497 = vlaneseq
    %v498 = vshrl.u32 %v497, 7
    %v499 = vsub.s32 %v496, %v498
    %v500 = vrot.slane %v90, %v499
    %v502 = vunpack.c.l.s4 1983009808
    %v503 = vunpack.c.0.s8 %v502
    %v504 = vlaneseq
    %v505 = vshrl.u32 %v504, 7
    %v506 = vsub.s32 %v503, %v505
    %v507 = vrot.slane %v493, %v506
    %v508 = vcombine.high %v500, %v500
    %v509 = vcombine.high %v507, %v507
    %v510 = vcombine.high %v91, %v91
    %v512 = vunpack.c.l.s4 1983009808
    %v513 = vunpack.c.0.s8 %v512
    %v514 = vlaneseq
    %v515 = vshrl.u32 %v514, 7
    %v516 = vsub.s32 %v513, %v515
    %v517 = vrot.slane %v91, %v516
    %v519 = vunpack.c.l.s4 1983009808
    %v520 = vunpack.c.0.s8 %v519
    %v521 = vlaneseq
    %v522 = vshrl.u32 %v521, 7
    %v523 = vsub.s32 %v520, %v522
    %v524 = vrot.slane %v510, %v523
    %v525 = vcombine.high %v517, %v517
    %v526 = vcombine.high %v524, %v524
    %v527 = vcombine.high %v92, %v92
    %v529 = vunpack.c.l.s4 1983009808
    %v530 = vunpack.c.0.s8 %v529
    %v531 = vlaneseq
    %v532 = vshrl.u32 %v531, 7
    %v533 = vsub.s32 %v530, %v532
    %v534 = vrot.slane %v92, %v533
    %v536 = vunpack.c.l.s4 1983009808
    %v537 = vunpack.c.0.s8 %v536
    %v538 = vlaneseq
    %v539 = vshrl.u32 %v538, 7
    %v540 = vsub.s32 %v537, %v539
    %v541 = vrot.slane %v527, %v540
    %v542 = vcombine.high %v534, %v534
    %v543 = vcombine.high %v541, %v541
    %v544 = vcombine.high %v93, %v93
    %v546 = vunpack.c.l.s4 1983009808
    %v547 = vunpack.c.0.s8 %v546
    %v548 = vlaneseq
    %v549 = vshrl.u32 %v548, 7
    %v550 = vsub.s32 %v547, %v549
    %v551 = vrot.slane %v93, %v550
    %v553 = vunpack.c.l.s4 1983009808
    %v554 = vunpack.c.0.s8 %v553
    %v555 = vlaneseq
    %v556 = vshrl.u32 %v555, 7
    %v557 = vsub.s32 %v554, %v556
    %v558 = vrot.slane %v544, %v557
    %v559 = vcombine.high %v551, %v551
    %v560 = vcombine.high %v558, %v558
    %v561 = vcombine.high %v94, %v94
    %v563 = vunpack.c.l.s4 1983009808
    %v564 = vunpack.c.0.s8 %v563
    %v565 = vlaneseq
    %v566 = vshrl.u32 %v565, 7
    %v567 = vsub.s32 %v564, %v566
    %v568 = vrot.slane %v94, %v567
    %v570 = vunpack.c.l.s4 1983009808
    %v571 = vunpack.c.0.s8 %v570
    %v572 = vlaneseq
    %v573 = vshrl.u32 %v572, 7
    %v574 = vsub.s32 %v571, %v573
    %v575 = vrot.slane %v561, %v574
    %v576 = vcombine.high %v568, %v568
    %v577 = vcombine.high %v575, %v575
    %v578 = vcombine.high %v95, %v95
    %v580 = vunpack.c.l.s4 1983009808
    %v581 = vunpack.c.0.s8 %v580
    %v582 = vlaneseq
    %v583 = vshrl.u32 %v582, 7
    %v584 = vsub.s32 %v581, %v583
    %v585 = vrot.slane %v95, %v584
    %v587 = vunpack.c.l.s4 1983009808
    %v588 = vunpack.c.0.s8 %v587
    %v589 = vlaneseq
    %v590 = vshrl.u32 %v589, 7
    %v591 = vsub.s32 %v588, %v590
    %v592 = vrot.slane %v578, %v591
    %v593 = vcombine.high %v585, %v585
    %v594 = vcombine.high %v592, %v592
    %619 = vmatprep.subr.mxu0 0.0
    %620 = vmatpush1.msra.mxu0 %v96
    %621 = vmatprep.subr.mxu0 0.0
    %622 = vmatpush1.msra.mxu0 %v97
    %623 = vmatprep.subr.mxu0 0.0
    %624 = vmatpush1.msra.mxu0 %v98
    %625 = vmatprep.subr.mxu0 0.0
    %626 = vmatpush1.msra.mxu0 %v99
    %627 = vmatprep.subr.mxu0 0.0
    %628 = vmatpush1.msra.mxu0 %v100
    %629 = vmatprep.subr.mxu0 0.0
    %630 = vmatpush1.msra.mxu0 %v101
    %631 = vmatprep.subr.mxu0 0.0
    %632 = vmatpush1.msra.mxu0 %v102
    %633 = vmatprep.subr.mxu0 0.0
    %634 = vmatpush1.msra.mxu0 %v103
    %635 = vmatprep.subr.mxu0 0.0
    %636 = vmatpush1.msra.mxu0 %v104
    %637 = vmatprep.subr.mxu0 0.0
    %638 = vmatpush1.msra.mxu0 %v105
    %639 = vmatprep.subr.mxu0 0.0
    %640 = vmatpush1.msra.mxu0 %v106
    %641 = vmatprep.subr.mxu0 0.0
    %642 = vmatpush1.msra.mxu0 %v107
    %643 = vmatprep.subr.mxu0 0.0
    %644 = vmatpush1.msra.mxu0 %v108
    %645 = vmatprep.subr.mxu0 0.0
    %646 = vmatpush1.msra.mxu0 %v109
    %647 = vmatprep.subr.mxu0 0.0
    %648 = vmatpush1.msra.mxu0 %v110
    %649 = vmatprep.subr.mxu0 0.0
    %650 = vmatpush1.msra.mxu0 %v111
    %651 = vmatprep.subr.mxu0 0.0
    %652 = vmatpush1.msra.mxu0 %v112
    %653 = vmatprep.subr.mxu0 0.0
    %654 = vmatpush1.msra.mxu0 %v113
    %655 = vmatprep.subr.mxu0 0.0
    %656 = vmatpush1.msra.mxu0 %v114
    %657 = vmatprep.subr.mxu0 0.0
    %658 = vmatpush1.msra.mxu0 %v115
    %659 = vmatprep.subr.mxu0 0.0
    %660 = vmatpush1.msra.mxu0 %v116
    %661 = vmatprep.subr.mxu0 0.0
    %662 = vmatpush1.msra.mxu0 %v117
    %663 = vmatprep.subr.mxu0 0.0
    %664 = vmatpush1.msra.mxu0 %v118
    %665 = vmatprep.subr.mxu0 0.0
    %666 = vmatpush1.msra.mxu0 %v119
    %667 = vmatprep.subr.mxu0 0.0
    %668 = vmatpush1.msra.mxu0 %v120
    %669 = vmatprep.subr.mxu0 0.0
    %670 = vmatpush1.msra.mxu0 %v121
    %671 = vmatprep.subr.mxu0 0.0
    %672 = vmatpush1.msra.mxu0 %v122
    %673 = vmatprep.subr.mxu0 0.0
    %674 = vmatpush1.msra.mxu0 %v123
    %675 = vmatprep.subr.mxu0 0.0
    %676 = vmatpush1.msra.mxu0 %v124
    %677 = vmatprep.subr.mxu0 0.0
    %678 = vmatpush1.msra.mxu0 %v125
    %679 = vmatprep.subr.mxu0 0.0
    %680 = vmatpush1.msra.mxu0 %v126
    %681 = vmatprep.subr.mxu0 0.0
    %682 = vmatpush1.msra.mxu0 %v127
    %683 = vmatprep.mubr.f32.mxu0 %v508
    %684 = vmatmul.mubr.f32.gmra.mrb[0].mxu0 %v500
    %v685 = vpop.f32.mrb[0].mxu0
    %v686 = vadd.f32 %v485, %v685
    %v687 = vpop.f32.mrb[0].mxu0
    %688 = vdwg.mxu0
    %689 = vmatprep.subr.mxu0 0.0
    %690 = vmatpush1.msra.mxu0 %v128
    %691 = vmatprep.subr.mxu0 0.0
    %692 = vmatpush1.msra.mxu0 %v129
    %693 = vmatprep.subr.mxu0 0.0
    %694 = vmatpush1.msra.mxu0 %v130
    %695 = vmatprep.subr.mxu0 0.0
    %696 = vmatpush1.msra.mxu0 %v131
    %697 = vmatprep.subr.mxu0 0.0
    %698 = vmatpush1.msra.mxu0 %v132
    %699 = vmatprep.subr.mxu0 0.0
    %700 = vmatpush1.msra.mxu0 %v133
    %701 = vmatprep.subr.mxu0 0.0
    %702 = vmatpush1.msra.mxu0 %v134
    %703 = vmatprep.subr.mxu0 0.0
    %704 = vmatpush1.msra.mxu0 %v135
    %705 = vmatprep.subr.mxu0 0.0
    %706 = vmatpush1.msra.mxu0 %v136
    %707 = vmatprep.subr.mxu0 0.0
    %708 = vmatpush1.msra.mxu0 %v137
    %709 = vmatprep.subr.mxu0 0.0
    %710 = vmatpush1.msra.mxu0 %v138
    %711 = vmatprep.subr.mxu0 0.0
    %712 = vmatpush1.msra.mxu0 %v139
    %713 = vmatprep.subr.mxu0 0.0
    %714 = vmatpush1.msra.mxu0 %v140
    %715 = vmatprep.subr.mxu0 0.0
    %716 = vmatpush1.msra.mxu0 %v141
    %717 = vmatprep.subr.mxu0 0.0
    %718 = vmatpush1.msra.mxu0 %v142
    %719 = vmatprep.subr.mxu0 0.0
    %720 = vmatpush1.msra.mxu0 %v143
    %721 = vmatprep.subr.mxu0 0.0
    %722 = vmatpush1.msra.mxu0 %v144
    %723 = vmatprep.subr.mxu0 0.0
    %724 = vmatpush1.msra.mxu0 %v145
    %725 = vmatprep.subr.mxu0 0.0
    %726 = vmatpush1.msra.mxu0 %v146
    %727 = vmatprep.subr.mxu0 0.0
    %728 = vmatpush1.msra.mxu0 %v147
    %729 = vmatprep.subr.mxu0 0.0
    %730 = vmatpush1.msra.mxu0 %v148
    %731 = vmatprep.subr.mxu0 0.0
    %732 = vmatpush1.msra.mxu0 %v149
    %733 = vmatprep.subr.mxu0 0.0
    %734 = vmatpush1.msra.mxu0 %v150
    %735 = vmatprep.subr.mxu0 0.0
    %736 = vmatpush1.msra.mxu0 %v151
    %737 = vmatprep.subr.mxu0 0.0
    %738 = vmatpush1.msra.mxu0 %v152
    %739 = vmatprep.subr.mxu0 0.0
    %740 = vmatpush1.msra.mxu0 %v153
    %741 = vmatprep.subr.mxu0 0.0
    %742 = vmatpush1.msra.mxu0 %v154
    %743 = vmatprep.subr.mxu0 0.0
    %744 = vmatpush1.msra.mxu0 %v155
    %745 = vmatprep.subr.mxu0 0.0
    %746 = vmatpush1.msra.mxu0 %v156
    %747 = vmatprep.subr.mxu0 0.0
    %748 = vmatpush1.msra.mxu0 %v157
    %749 = vmatprep.subr.mxu0 0.0
    %750 = vmatpush1.msra.mxu0 %v158
    %751 = vmatprep.subr.mxu0 0.0
    %752 = vmatpush1.msra.mxu0 %v159
    %753 = vmatprep.mubr.f32.mxu0 %v509
    %754 = vmatmul.mubr.f32.gmra.mrb[0].mxu0 %v507
    %v755 = vpop.f32.mrb[0].mxu0
    %v756 = vadd.f32 %v686, %v755
    %v757 = vpop.f32.mrb[0].mxu0
    %758 = vdwg.mxu0
    %759 = vmatprep.subr.mxu0 0.0
    %760 = vmatpush1.msra.mxu0 %v160
    %761 = vmatprep.subr.mxu0 0.0
    %762 = vmatpush1.msra.mxu0 %v161
    %763 = vmatprep.subr.mxu0 0.0
    %764 = vmatpush1.msra.mxu0 %v162
    %765 = vmatprep.subr.mxu0 0.0
    %766 = vmatpush1.msra.mxu0 %v163
    %767 = vmatprep.subr.mxu0 0.0
    %768 = vmatpush1.msra.mxu0 %v164
    %769 = vmatprep.subr.mxu0 0.0
    %770 = vmatpush1.msra.mxu0 %v165
    %771 = vmatprep.subr.mxu0 0.0
    %772 = vmatpush1.msra.mxu0 %v166
    %773 = vmatprep.subr.mxu0 0.0
    %774 = vmatpush1.msra.mxu0 %v167
    %775 = vmatprep.subr.mxu0 0.0
    %776 = vmatpush1.msra.mxu0 %v168
    %777 = vmatprep.subr.mxu0 0.0
    %778 = vmatpush1.msra.mxu0 %v169
    %779 = vmatprep.subr.mxu0 0.0
    %780 = vmatpush1.msra.mxu0 %v170
    %781 = vmatprep.subr.mxu0 0.0
    %782 = vmatpush1.msra.mxu0 %v171
    %783 = vmatprep.subr.mxu0 0.0
    %784 = vmatpush1.msra.mxu0 %v172
    %785 = vmatprep.subr.mxu0 0.0
    %786 = vmatpush1.msra.mxu0 %v173
    %787 = vmatprep.subr.mxu0 0.0
    %788 = vmatpush1.msra.mxu0 %v174
    %789 = vmatprep.subr.mxu0 0.0
    %790 = vmatpush1.msra.mxu0 %v175
    %791 = vmatprep.subr.mxu0 0.0
    %792 = vmatpush1.msra.mxu0 %v176
    %793 = vmatprep.subr.mxu0 0.0
    %794 = vmatpush1.msra.mxu0 %v177
    %795 = vmatprep.subr.mxu0 0.0
    %796 = vmatpush1.msra.mxu0 %v178
    %797 = vmatprep.subr.mxu0 0.0
    %798 = vmatpush1.msra.mxu0 %v179
    %799 = vmatprep.subr.mxu0 0.0
    %800 = vmatpush1.msra.mxu0 %v180
    %801 = vmatprep.subr.mxu0 0.0
    %802 = vmatpush1.msra.mxu0 %v181
    %803 = vmatprep.subr.mxu0 0.0
    %804 = vmatpush1.msra.mxu0 %v182
    %805 = vmatprep.subr.mxu0 0.0
    %806 = vmatpush1.msra.mxu0 %v183
    %807 = vmatprep.subr.mxu0 0.0
    %808 = vmatpush1.msra.mxu0 %v184
    %809 = vmatprep.subr.mxu0 0.0
    %810 = vmatpush1.msra.mxu0 %v185
    %811 = vmatprep.subr.mxu0 0.0
    %812 = vmatpush1.msra.mxu0 %v186
    %813 = vmatprep.subr.mxu0 0.0
    %814 = vmatpush1.msra.mxu0 %v187
    %815 = vmatprep.subr.mxu0 0.0
    %816 = vmatpush1.msra.mxu0 %v188
    %817 = vmatprep.subr.mxu0 0.0
    %818 = vmatpush1.msra.mxu0 %v189
    %819 = vmatprep.subr.mxu0 0.0
    %820 = vmatpush1.msra.mxu0 %v190
    %821 = vmatprep.subr.mxu0 0.0
    %822 = vmatpush1.msra.mxu0 %v191
    %823 = vmatprep.mubr.f32.mxu0 %v525
    %824 = vmatmul.mubr.f32.gmra.mrb[0].mxu0 %v517
    %v825 = vpop.f32.mrb[0].mxu0
    %v826 = vadd.f32 %v756, %v825
    %v827 = vpop.f32.mrb[0].mxu0
    %828 = vdwg.mxu0
    %829 = vmatprep.subr.mxu0 0.0
    %830 = vmatpush1.msra.mxu0 %v192
    %831 = vmatprep.subr.mxu0 0.0
    %832 = vmatpush1.msra.mxu0 %v193
    %833 = vmatprep.subr.mxu0 0.0
    %834 = vmatpush1.msra.mxu0 %v194
    %835 = vmatprep.subr.mxu0 0.0
    %836 = vmatpush1.msra.mxu0 %v195
    %837 = vmatprep.subr.mxu0 0.0
    %838 = vmatpush1.msra.mxu0 %v196
    %839 = vmatprep.subr.mxu0 0.0
    %840 = vmatpush1.msra.mxu0 %v197
    %841 = vmatprep.subr.mxu0 0.0
    %842 = vmatpush1.msra.mxu0 %v198
    %843 = vmatprep.subr.mxu0 0.0
    %844 = vmatpush1.msra.mxu0 %v199
    %845 = vmatprep.subr.mxu0 0.0
    %846 = vmatpush1.msra.mxu0 %v200
    %847 = vmatprep.subr.mxu0 0.0
    %848 = vmatpush1.msra.mxu0 %v201
    %849 = vmatprep.subr.mxu0 0.0
    %850 = vmatpush1.msra.mxu0 %v202
    %851 = vmatprep.subr.mxu0 0.0
    %852 = vmatpush1.msra.mxu0 %v203
    %853 = vmatprep.subr.mxu0 0.0
    %854 = vmatpush1.msra.mxu0 %v204
    %855 = vmatprep.subr.mxu0 0.0
    %856 = vmatpush1.msra.mxu0 %v205
    %857 = vmatprep.subr.mxu0 0.0
    %858 = vmatpush1.msra.mxu0 %v206
    %859 = vmatprep.subr.mxu0 0.0
    %860 = vmatpush1.msra.mxu0 %v207
    %861 = vmatprep.subr.mxu0 0.0
    %862 = vmatpush1.msra.mxu0 %v208
    %863 = vmatprep.subr.mxu0 0.0
    %864 = vmatpush1.msra.mxu0 %v209
    %865 = vmatprep.subr.mxu0 0.0
    %866 = vmatpush1.msra.mxu0 %v210
    %867 = vmatprep.subr.mxu0 0.0
    %868 = vmatpush1.msra.mxu0 %v211
    %869 = vmatprep.subr.mxu0 0.0
    %870 = vmatpush1.msra.mxu0 %v212
    %871 = vmatprep.subr.mxu0 0.0
    %872 = vmatpush1.msra.mxu0 %v213
    %873 = vmatprep.subr.mxu0 0.0
    %874 = vmatpush1.msra.mxu0 %v214
    %875 = vmatprep.subr.mxu0 0.0
    %876 = vmatpush1.msra.mxu0 %v215
    %877 = vmatprep.subr.mxu0 0.0
    %878 = vmatpush1.msra.mxu0 %v216
    %879 = vmatprep.subr.mxu0 0.0
    %880 = vmatpush1.msra.mxu0 %v217
    %881 = vmatprep.subr.mxu0 0.0
    %882 = vmatpush1.msra.mxu0 %v218
    %883 = vmatprep.subr.mxu0 0.0
    %884 = vmatpush1.msra.mxu0 %v219
    %885 = vmatprep.subr.mxu0 0.0
    %886 = vmatpush1.msra.mxu0 %v220
    %887 = vmatprep.subr.mxu0 0.0
    %888 = vmatpush1.msra.mxu0 %v221
    %889 = vmatprep.subr.mxu0 0.0
    %890 = vmatpush1.msra.mxu0 %v222
    %891 = vmatprep.subr.mxu0 0.0
    %892 = vmatpush1.msra.mxu0 %v223
    %893 = vmatprep.mubr.f32.mxu0 %v526
    %894 = vmatmul.mubr.f32.gmra.mrb[0].mxu0 %v524
    %v895 = vpop.f32.mrb[0].mxu0
    %v896 = vadd.f32 %v826, %v895
    %v897 = vpop.f32.mrb[0].mxu0
    %898 = vdwg.mxu0
    %899 = vmatprep.subr.mxu0 0.0
    %900 = vmatpush1.msra.mxu0 %v224
    %901 = vmatprep.subr.mxu0 0.0
    %902 = vmatpush1.msra.mxu0 %v225
    %903 = vmatprep.subr.mxu0 0.0
    %904 = vmatpush1.msra.mxu0 %v226
    %905 = vmatprep.subr.mxu0 0.0
    %906 = vmatpush1.msra.mxu0 %v227
    %907 = vmatprep.subr.mxu0 0.0
    %908 = vmatpush1.msra.mxu0 %v228
    %909 = vmatprep.subr.mxu0 0.0
    %910 = vmatpush1.msra.mxu0 %v229
    %911 = vmatprep.subr.mxu0 0.0
    %912 = vmatpush1.msra.mxu0 %v230
    %913 = vmatprep.subr.mxu0 0.0
    %914 = vmatpush1.msra.mxu0 %v231
    %915 = vmatprep.subr.mxu0 0.0
    %916 = vmatpush1.msra.mxu0 %v232
    %917 = vmatprep.subr.mxu0 0.0
    %918 = vmatpush1.msra.mxu0 %v233
    %919 = vmatprep.subr.mxu0 0.0
    %920 = vmatpush1.msra.mxu0 %v234
    %921 = vmatprep.subr.mxu0 0.0
    %922 = vmatpush1.msra.mxu0 %v235
    %923 = vmatprep.subr.mxu0 0.0
    %924 = vmatpush1.msra.mxu0 %v236
    %925 = vmatprep.subr.mxu0 0.0
    %926 = vmatpush1.msra.mxu0 %v237
    %927 = vmatprep.subr.mxu0 0.0
    %928 = vmatpush1.msra.mxu0 %v238
    %929 = vmatprep.subr.mxu0 0.0
    %930 = vmatpush1.msra.mxu0 %v239
    %931 = vmatprep.subr.mxu0 0.0
    %932 = vmatpush1.msra.mxu0 %v240
    %933 = vmatprep.subr.mxu0 0.0
    %934 = vmatpush1.msra.mxu0 %v241
    %935 = vmatprep.subr.mxu0 0.0
    %936 = vmatpush1.msra.mxu0 %v242
    %937 = vmatprep.subr.mxu0 0.0
    %938 = vmatpush1.msra.mxu0 %v243
    %939 = vmatprep.subr.mxu0 0.0
    %940 = vmatpush1.msra.mxu0 %v244
    %941 = vmatprep.subr.mxu0 0.0
    %942 = vmatpush1.msra.mxu0 %v245
    %943 = vmatprep.subr.mxu0 0.0
    %944 = vmatpush1.msra.mxu0 %v246
    %945 = vmatprep.subr.mxu0 0.0
    %946 = vmatpush1.msra.mxu0 %v247
    %947 = vmatprep.subr.mxu0 0.0
    %948 = vmatpush1.msra.mxu0 %v248
    %949 = vmatprep.subr.mxu0 0.0
    %950 = vmatpush1.msra.mxu0 %v249
    %951 = vmatprep.subr.mxu0 0.0
    %952 = vmatpush1.msra.mxu0 %v250
    %953 = vmatprep.subr.mxu0 0.0
    %954 = vmatpush1.msra.mxu0 %v251
    %955 = vmatprep.subr.mxu0 0.0
    %956 = vmatpush1.msra.mxu0 %v252
    %957 = vmatprep.subr.mxu0 0.0
    %958 = vmatpush1.msra.mxu0 %v253
    %959 = vmatprep.subr.mxu0 0.0
    %960 = vmatpush1.msra.mxu0 %v254
    %961 = vmatprep.subr.mxu0 0.0
    %962 = vmatpush1.msra.mxu0 %v255
    %963 = vmatprep.mubr.f32.mxu0 %v542
    %964 = vmatmul.mubr.f32.gmra.mrb[0].mxu0 %v534
    %v965 = vpop.f32.mrb[0].mxu0
    %v966 = vadd.f32 %v896, %v965
    %v967 = vpop.f32.mrb[0].mxu0
    %968 = vdwg.mxu0
    %969 = vmatprep.subr.mxu0 0.0
    %970 = vmatpush1.msra.mxu0 %v256
    %971 = vmatprep.subr.mxu0 0.0
    %972 = vmatpush1.msra.mxu0 %v257
    %973 = vmatprep.subr.mxu0 0.0
    %974 = vmatpush1.msra.mxu0 %v258
    %975 = vmatprep.subr.mxu0 0.0
    %976 = vmatpush1.msra.mxu0 %v259
    %977 = vmatprep.subr.mxu0 0.0
    %978 = vmatpush1.msra.mxu0 %v260
    %979 = vmatprep.subr.mxu0 0.0
    %980 = vmatpush1.msra.mxu0 %v261
    %981 = vmatprep.subr.mxu0 0.0
    %982 = vmatpush1.msra.mxu0 %v262
    %983 = vmatprep.subr.mxu0 0.0
    %984 = vmatpush1.msra.mxu0 %v263
    %985 = vmatprep.subr.mxu0 0.0
    %986 = vmatpush1.msra.mxu0 %v264
    %987 = vmatprep.subr.mxu0 0.0
    %988 = vmatpush1.msra.mxu0 %v265
    %989 = vmatprep.subr.mxu0 0.0
    %990 = vmatpush1.msra.mxu0 %v266
    %991 = vmatprep.subr.mxu0 0.0
    %992 = vmatpush1.msra.mxu0 %v267
    %993 = vmatprep.subr.mxu0 0.0
    %994 = vmatpush1.msra.mxu0 %v268
    %995 = vmatprep.subr.mxu0 0.0
    %996 = vmatpush1.msra.mxu0 %v269
    %997 = vmatprep.subr.mxu0 0.0
    %998 = vmatpush1.msra.mxu0 %v270
    %999 = vmatprep.subr.mxu0 0.0
    %1000 = vmatpush1.msra.mxu0 %v271
    %1001 = vmatprep.subr.mxu0 0.0
    %1002 = vmatpush1.msra.mxu0 %v272
    %1003 = vmatprep.subr.mxu0 0.0
    %1004 = vmatpush1.msra.mxu0 %v273
    %1005 = vmatprep.subr.mxu0 0.0
    %1006 = vmatpush1.msra.mxu0 %v274
    %1007 = vmatprep.subr.mxu0 0.0
    %1008 = vmatpush1.msra.mxu0 %v275
    %1009 = vmatprep.subr.mxu0 0.0
    %1010 = vmatpush1.msra.mxu0 %v276
    %1011 = vmatprep.subr.mxu0 0.0
    %1012 = vmatpush1.msra.mxu0 %v277
    %1013 = vmatprep.subr.mxu0 0.0
    %1014 = vmatpush1.msra.mxu0 %v278
    %1015 = vmatprep.subr.mxu0 0.0
    %1016 = vmatpush1.msra.mxu0 %v279
    %1017 = vmatprep.subr.mxu0 0.0
    %1018 = vmatpush1.msra.mxu0 %v280
    %1019 = vmatprep.subr.mxu0 0.0
    %1020 = vmatpush1.msra.mxu0 %v281
    %1021 = vmatprep.subr.mxu0 0.0
    %1022 = vmatpush1.msra.mxu0 %v282
    %1023 = vmatprep.subr.mxu0 0.0
    %1024 = vmatpush1.msra.mxu0 %v283
    %1025 = vmatprep.subr.mxu0 0.0
    %1026 = vmatpush1.msra.mxu0 %v284
    %1027 = vmatprep.subr.mxu0 0.0
    %1028 = vmatpush1.msra.mxu0 %v285
    %1029 = vmatprep.subr.mxu0 0.0
    %1030 = vmatpush1.msra.mxu0 %v286
    %1031 = vmatprep.subr.mxu0 0.0
    %1032 = vmatpush1.msra.mxu0 %v287
    %1033 = vmatprep.mubr.f32.mxu0 %v543
    %1034 = vmatmul.mubr.f32.gmra.mrb[0].mxu0 %v541
    %v1035 = vpop.f32.mrb[0].mxu0
    %v1036 = vadd.f32 %v966, %v1035
    %v1037 = vpop.f32.mrb[0].mxu0
    %1038 = vdwg.mxu0
    %1039 = vmatprep.subr.mxu0 0.0
    %1040 = vmatpush1.msra.mxu0 %v288
    %1041 = vmatprep.subr.mxu0 0.0
    %1042 = vmatpush1.msra.mxu0 %v289
    %1043 = vmatprep.subr.mxu0 0.0
    %1044 = vmatpush1.msra.mxu0 %v290
    %1045 = vmatprep.subr.mxu0 0.0
    %1046 = vmatpush1.msra.mxu0 %v291
    %1047 = vmatprep.subr.mxu0 0.0
    %1048 = vmatpush1.msra.mxu0 %v292
    %1049 = vmatprep.subr.mxu0 0.0
    %1050 = vmatpush1.msra.mxu0 %v293
    %1051 = vmatprep.subr.mxu0 0.0
    %1052 = vmatpush1.msra.mxu0 %v294
    %1053 = vmatprep.subr.mxu0 0.0
    %1054 = vmatpush1.msra.mxu0 %v295
    %1055 = vmatprep.subr.mxu0 0.0
    %1056 = vmatpush1.msra.mxu0 %v296
    %1057 = vmatprep.subr.mxu0 0.0
    %1058 = vmatpush1.msra.mxu0 %v297
    %1059 = vmatprep.subr.mxu0 0.0
    %1060 = vmatpush1.msra.mxu0 %v298
    %1061 = vmatprep.subr.mxu0 0.0
    %1062 = vmatpush1.msra.mxu0 %v299
    %1063 = vmatprep.subr.mxu0 0.0
    %1064 = vmatpush1.msra.mxu0 %v300
    %1065 = vmatprep.subr.mxu0 0.0
    %1066 = vmatpush1.msra.mxu0 %v301
    %1067 = vmatprep.subr.mxu0 0.0
    %1068 = vmatpush1.msra.mxu0 %v302
    %1069 = vmatprep.subr.mxu0 0.0
    %1070 = vmatpush1.msra.mxu0 %v303
    %1071 = vmatprep.subr.mxu0 0.0
    %1072 = vmatpush1.msra.mxu0 %v304
    %1073 = vmatprep.subr.mxu0 0.0
    %1074 = vmatpush1.msra.mxu0 %v305
    %1075 = vmatprep.subr.mxu0 0.0
    %1076 = vmatpush1.msra.mxu0 %v306
    %1077 = vmatprep.subr.mxu0 0.0
    %1078 = vmatpush1.msra.mxu0 %v307
    %1079 = vmatprep.subr.mxu0 0.0
    %1080 = vmatpush1.msra.mxu0 %v308
    %1081 = vmatprep.subr.mxu0 0.0
    %1082 = vmatpush1.msra.mxu0 %v309
    %1083 = vmatprep.subr.mxu0 0.0
    %1084 = vmatpush1.msra.mxu0 %v310
    %1085 = vmatprep.subr.mxu0 0.0
    %1086 = vmatpush1.msra.mxu0 %v311
    %1087 = vmatprep.subr.mxu0 0.0
    %1088 = vmatpush1.msra.mxu0 %v312
    %1089 = vmatprep.subr.mxu0 0.0
    %1090 = vmatpush1.msra.mxu0 %v313
    %1091 = vmatprep.subr.mxu0 0.0
    %1092 = vmatpush1.msra.mxu0 %v314
    %1093 = vmatprep.subr.mxu0 0.0
    %1094 = vmatpush1.msra.mxu0 %v315
    %1095 = vmatprep.subr.mxu0 0.0
    %1096 = vmatpush1.msra.mxu0 %v316
    %1097 = vmatprep.subr.mxu0 0.0
    %1098 = vmatpush1.msra.mxu0 %v317
    %1099 = vmatprep.subr.mxu0 0.0
    %1100 = vmatpush1.msra.mxu0 %v318
    %1101 = vmatprep.subr.mxu0 0.0
    %1102 = vmatpush1.msra.mxu0 %v319
    %1103 = vmatprep.mubr.f32.mxu0 %v559
    %1104 = vmatmul.mubr.f32.gmra.mrb[0].mxu0 %v551
    %v1105 = vpop.f32.mrb[0].mxu0
    %v1106 = vadd.f32 %v1036, %v1105
    %v1107 = vpop.f32.mrb[0].mxu0
    %1108 = vdwg.mxu0
    %1109 = vmatprep.subr.mxu0 0.0
    %1110 = vmatpush1.msra.mxu0 %v320
    %1111 = vmatprep.subr.mxu0 0.0
    %1112 = vmatpush1.msra.mxu0 %v321
    %1113 = vmatprep.subr.mxu0 0.0
    %1114 = vmatpush1.msra.mxu0 %v322
    %1115 = vmatprep.subr.mxu0 0.0
    %1116 = vmatpush1.msra.mxu0 %v323
    %1117 = vmatprep.subr.mxu0 0.0
    %1118 = vmatpush1.msra.mxu0 %v324
    %1119 = vmatprep.subr.mxu0 0.0
    %1120 = vmatpush1.msra.mxu0 %v325
    %1121 = vmatprep.subr.mxu0 0.0
    %1122 = vmatpush1.msra.mxu0 %v326
    %1123 = vmatprep.subr.mxu0 0.0
    %1124 = vmatpush1.msra.mxu0 %v327
    %1125 = vmatprep.subr.mxu0 0.0
    %1126 = vmatpush1.msra.mxu0 %v328
    %1127 = vmatprep.subr.mxu0 0.0
    %1128 = vmatpush1.msra.mxu0 %v329
    %1129 = vmatprep.subr.mxu0 0.0
    %1130 = vmatpush1.msra.mxu0 %v330
    %1131 = vmatprep.subr.mxu0 0.0
    %1132 = vmatpush1.msra.mxu0 %v331
    %1133 = vmatprep.subr.mxu0 0.0
    %1134 = vmatpush1.msra.mxu0 %v332
    %1135 = vmatprep.subr.mxu0 0.0
    %1136 = vmatpush1.msra.mxu0 %v333
    %1137 = vmatprep.subr.mxu0 0.0
    %1138 = vmatpush1.msra.mxu0 %v334
    %1139 = vmatprep.subr.mxu0 0.0
    %1140 = vmatpush1.msra.mxu0 %v335
    %1141 = vmatprep.subr.mxu0 0.0
    %1142 = vmatpush1.msra.mxu0 %v336
    %1143 = vmatprep.subr.mxu0 0.0
    %1144 = vmatpush1.msra.mxu0 %v337
    %1145 = vmatprep.subr.mxu0 0.0
    %1146 = vmatpush1.msra.mxu0 %v338
    %1147 = vmatprep.subr.mxu0 0.0
    %1148 = vmatpush1.msra.mxu0 %v339
    %1149 = vmatprep.subr.mxu0 0.0
    %1150 = vmatpush1.msra.mxu0 %v340
    %1151 = vmatprep.subr.mxu0 0.0
    %1152 = vmatpush1.msra.mxu0 %v341
    %1153 = vmatprep.subr.mxu0 0.0
    %1154 = vmatpush1.msra.mxu0 %v342
    %1155 = vmatprep.subr.mxu0 0.0
    %1156 = vmatpush1.msra.mxu0 %v343
    %1157 = vmatprep.subr.mxu0 0.0
    %1158 = vmatpush1.msra.mxu0 %v344
    %1159 = vmatprep.subr.mxu0 0.0
    %1160 = vmatpush1.msra.mxu0 %v345
    %1161 = vmatprep.subr.mxu0 0.0
    %1162 = vmatpush1.msra.mxu0 %v346
    %1163 = vmatprep.subr.mxu0 0.0
    %1164 = vmatpush1.msra.mxu0 %v347
    %1165 = vmatprep.subr.mxu0 0.0
    %1166 = vmatpush1.msra.mxu0 %v348
    %1167 = vmatprep.subr.mxu0 0.0
    %1168 = vmatpush1.msra.mxu0 %v349
    %1169 = vmatprep.subr.mxu0 0.0
    %1170 = vmatpush1.msra.mxu0 %v350
    %1171 = vmatprep.subr.mxu0 0.0
    %1172 = vmatpush1.msra.mxu0 %v351
    %1173 = vmatprep.mubr.f32.mxu0 %v560
    %1174 = vmatmul.mubr.f32.gmra.mrb[0].mxu0 %v558
    %v1175 = vpop.f32.mrb[0].mxu0
    %v1176 = vadd.f32 %v1106, %v1175
    %v1177 = vpop.f32.mrb[0].mxu0
    %1178 = vdwg.mxu0
    %1179 = vmatprep.subr.mxu0 0.0
    %1180 = vmatpush1.msra.mxu0 %v352
    %1181 = vmatprep.subr.mxu0 0.0
    %1182 = vmatpush1.msra.mxu0 %v353
    %1183 = vmatprep.subr.mxu0 0.0
    %1184 = vmatpush1.msra.mxu0 %v354
    %1185 = vmatprep.subr.mxu0 0.0
    %1186 = vmatpush1.msra.mxu0 %v355
    %1187 = vmatprep.subr.mxu0 0.0
    %1188 = vmatpush1.msra.mxu0 %v356
    %1189 = vmatprep.subr.mxu0 0.0
    %1190 = vmatpush1.msra.mxu0 %v357
    %1191 = vmatprep.subr.mxu0 0.0
    %1192 = vmatpush1.msra.mxu0 %v358
    %1193 = vmatprep.subr.mxu0 0.0
    %1194 = vmatpush1.msra.mxu0 %v359
    %1195 = vmatprep.subr.mxu0 0.0
    %1196 = vmatpush1.msra.mxu0 %v360
    %1197 = vmatprep.subr.mxu0 0.0
    %1198 = vmatpush1.msra.mxu0 %v361
    %1199 = vmatprep.subr.mxu0 0.0
    %1200 = vmatpush1.msra.mxu0 %v362
    %1201 = vmatprep.subr.mxu0 0.0
    %1202 = vmatpush1.msra.mxu0 %v363
    %1203 = vmatprep.subr.mxu0 0.0
    %1204 = vmatpush1.msra.mxu0 %v364
    %1205 = vmatprep.subr.mxu0 0.0
    %1206 = vmatpush1.msra.mxu0 %v365
    %1207 = vmatprep.subr.mxu0 0.0
    %1208 = vmatpush1.msra.mxu0 %v366
    %1209 = vmatprep.subr.mxu0 0.0
    %1210 = vmatpush1.msra.mxu0 %v367
    %1211 = vmatprep.subr.mxu0 0.0
    %1212 = vmatpush1.msra.mxu0 %v368
    %1213 = vmatprep.subr.mxu0 0.0
    %1214 = vmatpush1.msra.mxu0 %v369
    %1215 = vmatprep.subr.mxu0 0.0
    %1216 = vmatpush1.msra.mxu0 %v370
    %1217 = vmatprep.subr.mxu0 0.0
    %1218 = vmatpush1.msra.mxu0 %v371
    %1219 = vmatprep.subr.mxu0 0.0
    %1220 = vmatpush1.msra.mxu0 %v372
    %1221 = vmatprep.subr.mxu0 0.0
    %1222 = vmatpush1.msra.mxu0 %v373
    %1223 = vmatprep.subr.mxu0 0.0
    %1224 = vmatpush1.msra.mxu0 %v374
    %1225 = vmatprep.subr.mxu0 0.0
    %1226 = vmatpush1.msra.mxu0 %v375
    %1227 = vmatprep.subr.mxu0 0.0
    %1228 = vmatpush1.msra.mxu0 %v376
    %1229 = vmatprep.subr.mxu0 0.0
    %1230 = vmatpush1.msra.mxu0 %v377
    %1231 = vmatprep.subr.mxu0 0.0
    %1232 = vmatpush1.msra.mxu0 %v378
    %1233 = vmatprep.subr.mxu0 0.0
    %1234 = vmatpush1.msra.mxu0 %v379
    %1235 = vmatprep.subr.mxu0 0.0
    %1236 = vmatpush1.msra.mxu0 %v380
    %1237 = vmatprep.subr.mxu0 0.0
    %1238 = vmatpush1.msra.mxu0 %v381
    %1239 = vmatprep.subr.mxu0 0.0
    %1240 = vmatpush1.msra.mxu0 %v382
    %1241 = vmatprep.subr.mxu0 0.0
    %1242 = vmatpush1.msra.mxu0 %v383
    %1243 = vmatprep.mubr.f32.mxu0 %v576
    %1244 = vmatmul.mubr.f32.gmra.mrb[0].mxu0 %v568
    %v1245 = vpop.f32.mrb[0].mxu0
    %v1246 = vadd.f32 %v1176, %v1245
    %v1247 = vpop.f32.mrb[0].mxu0
    %1248 = vdwg.mxu0
    %1249 = vmatprep.subr.mxu0 0.0
    %1250 = vmatpush1.msra.mxu0 %v384
    %1251 = vmatprep.subr.mxu0 0.0
    %1252 = vmatpush1.msra.mxu0 %v385
    %1253 = vmatprep.subr.mxu0 0.0
    %1254 = vmatpush1.msra.mxu0 %v386
    %1255 = vmatprep.subr.mxu0 0.0
    %1256 = vmatpush1.msra.mxu0 %v387
    %1257 = vmatprep.subr.mxu0 0.0
    %1258 = vmatpush1.msra.mxu0 %v388
    %1259 = vmatprep.subr.mxu0 0.0
    %1260 = vmatpush1.msra.mxu0 %v389
    %1261 = vmatprep.subr.mxu0 0.0
    %1262 = vmatpush1.msra.mxu0 %v390
    %1263 = vmatprep.subr.mxu0 0.0
    %1264 = vmatpush1.msra.mxu0 %v391
    %1265 = vmatprep.subr.mxu0 0.0
    %1266 = vmatpush1.msra.mxu0 %v392
    %1267 = vmatprep.subr.mxu0 0.0
    %1268 = vmatpush1.msra.mxu0 %v393
    %1269 = vmatprep.subr.mxu0 0.0
    %1270 = vmatpush1.msra.mxu0 %v394
    %1271 = vmatprep.subr.mxu0 0.0
    %1272 = vmatpush1.msra.mxu0 %v395
    %1273 = vmatprep.subr.mxu0 0.0
    %1274 = vmatpush1.msra.mxu0 %v396
    %1275 = vmatprep.subr.mxu0 0.0
    %1276 = vmatpush1.msra.mxu0 %v397
    %1277 = vmatprep.subr.mxu0 0.0
    %1278 = vmatpush1.msra.mxu0 %v398
    %1279 = vmatprep.subr.mxu0 0.0
    %1280 = vmatpush1.msra.mxu0 %v399
    %1281 = vmatprep.subr.mxu0 0.0
    %1282 = vmatpush1.msra.mxu0 %v400
    %1283 = vmatprep.subr.mxu0 0.0
    %1284 = vmatpush1.msra.mxu0 %v401
    %1285 = vmatprep.subr.mxu0 0.0
    %1286 = vmatpush1.msra.mxu0 %v402
    %1287 = vmatprep.subr.mxu0 0.0
    %1288 = vmatpush1.msra.mxu0 %v403
    %1289 = vmatprep.subr.mxu0 0.0
    %1290 = vmatpush1.msra.mxu0 %v404
    %1291 = vmatprep.subr.mxu0 0.0
    %1292 = vmatpush1.msra.mxu0 %v405
    %1293 = vmatprep.subr.mxu0 0.0
    %1294 = vmatpush1.msra.mxu0 %v406
    %1295 = vmatprep.subr.mxu0 0.0
    %1296 = vmatpush1.msra.mxu0 %v407
    %1297 = vmatprep.subr.mxu0 0.0
    %1298 = vmatpush1.msra.mxu0 %v408
    %1299 = vmatprep.subr.mxu0 0.0
    %1300 = vmatpush1.msra.mxu0 %v409
    %1301 = vmatprep.subr.mxu0 0.0
    %1302 = vmatpush1.msra.mxu0 %v410
    %1303 = vmatprep.subr.mxu0 0.0
    %1304 = vmatpush1.msra.mxu0 %v411
    %1305 = vmatprep.subr.mxu0 0.0
    %1306 = vmatpush1.msra.mxu0 %v412
    %1307 = vmatprep.subr.mxu0 0.0
    %1308 = vmatpush1.msra.mxu0 %v413
    %1309 = vmatprep.subr.mxu0 0.0
    %1310 = vmatpush1.msra.mxu0 %v414
    %1311 = vmatprep.subr.mxu0 0.0
    %1312 = vmatpush1.msra.mxu0 %v415
    %1313 = vmatprep.mubr.f32.mxu0 %v577
    %1314 = vmatmul.mubr.f32.gmra.mrb[0].mxu0 %v575
    %v1315 = vpop.f32.mrb[0].mxu0
    %v1316 = vadd.f32 %v1246, %v1315
    %v1317 = vpop.f32.mrb[0].mxu0
    %1318 = vdwg.mxu0
    %1319 = vmatprep.subr.mxu0 0.0
    %1320 = vmatpush1.msra.mxu0 %v416
    %1321 = vmatprep.subr.mxu0 0.0
    %1322 = vmatpush1.msra.mxu0 %v417
    %1323 = vmatprep.subr.mxu0 0.0
    %1324 = vmatpush1.msra.mxu0 %v418
    %1325 = vmatprep.subr.mxu0 0.0
    %1326 = vmatpush1.msra.mxu0 %v419
    %1327 = vmatprep.subr.mxu0 0.0
    %1328 = vmatpush1.msra.mxu0 %v420
    %1329 = vmatprep.subr.mxu0 0.0
    %1330 = vmatpush1.msra.mxu0 %v421
    %1331 = vmatprep.subr.mxu0 0.0
    %1332 = vmatpush1.msra.mxu0 %v422
    %1333 = vmatprep.subr.mxu0 0.0
    %1334 = vmatpush1.msra.mxu0 %v423
    %1335 = vmatprep.subr.mxu0 0.0
    %1336 = vmatpush1.msra.mxu0 %v424
    %1337 = vmatprep.subr.mxu0 0.0
    %1338 = vmatpush1.msra.mxu0 %v425
    %1339 = vmatprep.subr.mxu0 0.0
    %1340 = vmatpush1.msra.mxu0 %v426
    %1341 = vmatprep.subr.mxu0 0.0
    %1342 = vmatpush1.msra.mxu0 %v427
    %1343 = vmatprep.subr.mxu0 0.0
    %1344 = vmatpush1.msra.mxu0 %v428
    %1345 = vmatprep.subr.mxu0 0.0
    %1346 = vmatpush1.msra.mxu0 %v429
    %1347 = vmatprep.subr.mxu0 0.0
    %1348 = vmatpush1.msra.mxu0 %v430
    %1349 = vmatprep.subr.mxu0 0.0
    %1350 = vmatpush1.msra.mxu0 %v431
    %1351 = vmatprep.subr.mxu0 0.0
    %1352 = vmatpush1.msra.mxu0 %v432
    %1353 = vmatprep.subr.mxu0 0.0
    %1354 = vmatpush1.msra.mxu0 %v433
    %1355 = vmatprep.subr.mxu0 0.0
    %1356 = vmatpush1.msra.mxu0 %v434
    %1357 = vmatprep.subr.mxu0 0.0
    %1358 = vmatpush1.msra.mxu0 %v435
    %1359 = vmatprep.subr.mxu0 0.0
    %1360 = vmatpush1.msra.mxu0 %v436
    %1361 = vmatprep.subr.mxu0 0.0
    %1362 = vmatpush1.msra.mxu0 %v437
    %1363 = vmatprep.subr.mxu0 0.0
    %1364 = vmatpush1.msra.mxu0 %v438
    %1365 = vmatprep.subr.mxu0 0.0
    %1366 = vmatpush1.msra.mxu0 %v439
    %1367 = vmatprep.subr.mxu0 0.0
    %1368 = vmatpush1.msra.mxu0 %v440
    %1369 = vmatprep.subr.mxu0 0.0
    %1370 = vmatpush1.msra.mxu0 %v441
    %1371 = vmatprep.subr.mxu0 0.0
    %1372 = vmatpush1.msra.mxu0 %v442
    %1373 = vmatprep.subr.mxu0 0.0
    %1374 = vmatpush1.msra.mxu0 %v443
    %1375 = vmatprep.subr.mxu0 0.0
    %1376 = vmatpush1.msra.mxu0 %v444
    %1377 = vmatprep.subr.mxu0 0.0
    %1378 = vmatpush1.msra.mxu0 %v445
    %1379 = vmatprep.subr.mxu0 0.0
    %1380 = vmatpush1.msra.mxu0 %v446
    %1381 = vmatprep.subr.mxu0 0.0
    %1382 = vmatpush1.msra.mxu0 %v447
    %1383 = vmatprep.mubr.f32.mxu0 %v593
    %1384 = vmatmul.mubr.f32.gmra.mrb[0].mxu0 %v585
    %v1385 = vpop.f32.mrb[0].mxu0
    %v1386 = vadd.f32 %v1316, %v1385
    %v1387 = vpop.f32.mrb[0].mxu0
    %1388 = vdwg.mxu0
    %1389 = vmatprep.subr.mxu0 0.0
    %1390 = vmatpush1.msra.mxu0 %v448
    %1391 = vmatprep.subr.mxu0 0.0
    %1392 = vmatpush1.msra.mxu0 %v449
    %1393 = vmatprep.subr.mxu0 0.0
    %1394 = vmatpush1.msra.mxu0 %v450
    %1395 = vmatprep.subr.mxu0 0.0
    %1396 = vmatpush1.msra.mxu0 %v451
    %1397 = vmatprep.subr.mxu0 0.0
    %1398 = vmatpush1.msra.mxu0 %v452
    %1399 = vmatprep.subr.mxu0 0.0
    %1400 = vmatpush1.msra.mxu0 %v453
    %1401 = vmatprep.subr.mxu0 0.0
    %1402 = vmatpush1.msra.mxu0 %v454
    %1403 = vmatprep.subr.mxu0 0.0
    %1404 = vmatpush1.msra.mxu0 %v455
    %1405 = vmatprep.subr.mxu0 0.0
    %1406 = vmatpush1.msra.mxu0 %v456
    %1407 = vmatprep.subr.mxu0 0.0
    %1408 = vmatpush1.msra.mxu0 %v457
    %1409 = vmatprep.subr.mxu0 0.0
    %1410 = vmatpush1.msra.mxu0 %v458
    %1411 = vmatprep.subr.mxu0 0.0
    %1412 = vmatpush1.msra.mxu0 %v459
    %1413 = vmatprep.subr.mxu0 0.0
    %1414 = vmatpush1.msra.mxu0 %v460
    %1415 = vmatprep.subr.mxu0 0.0
    %1416 = vmatpush1.msra.mxu0 %v461
    %1417 = vmatprep.subr.mxu0 0.0
    %1418 = vmatpush1.msra.mxu0 %v462
    %1419 = vmatprep.subr.mxu0 0.0
    %1420 = vmatpush1.msra.mxu0 %v463
    %1421 = vmatprep.subr.mxu0 0.0
    %1422 = vmatpush1.msra.mxu0 %v464
    %1423 = vmatprep.subr.mxu0 0.0
    %1424 = vmatpush1.msra.mxu0 %v465
    %1425 = vmatprep.subr.mxu0 0.0
    %1426 = vmatpush1.msra.mxu0 %v466
    %1427 = vmatprep.subr.mxu0 0.0
    %1428 = vmatpush1.msra.mxu0 %v467
    %1429 = vmatprep.subr.mxu0 0.0
    %1430 = vmatpush1.msra.mxu0 %v468
    %1431 = vmatprep.subr.mxu0 0.0
    %1432 = vmatpush1.msra.mxu0 %v469
    %1433 = vmatprep.subr.mxu0 0.0
    %1434 = vmatpush1.msra.mxu0 %v470
    %1435 = vmatprep.subr.mxu0 0.0
    %1436 = vmatpush1.msra.mxu0 %v471
    %1437 = vmatprep.subr.mxu0 0.0
    %1438 = vmatpush1.msra.mxu0 %v472
    %1439 = vmatprep.subr.mxu0 0.0
    %1440 = vmatpush1.msra.mxu0 %v473
    %1441 = vmatprep.subr.mxu0 0.0
    %1442 = vmatpush1.msra.mxu0 %v474
    %1443 = vmatprep.subr.mxu0 0.0
    %1444 = vmatpush1.msra.mxu0 %v475
    %1445 = vmatprep.subr.mxu0 0.0
    %1446 = vmatpush1.msra.mxu0 %v476
    %1447 = vmatprep.subr.mxu0 0.0
    %1448 = vmatpush1.msra.mxu0 %v477
    %1449 = vmatprep.subr.mxu0 0.0
    %1450 = vmatpush1.msra.mxu0 %v478
    %1451 = vmatprep.subr.mxu0 0.0
    %1452 = vmatpush1.msra.mxu0 %v479
    %1453 = vmatprep.mubr.f32.mxu0 %v594
    %1454 = vmatmul.mubr.f32.gmra.mrb[0].mxu0 %v592
    %v1455 = vpop.f32.mrb[0].mxu0
    %v1456 = vadd.f32 %v1386, %v1455
    %v1457 = vpop.f32.mrb[0].mxu0
    %1458 = vdwg.mxu0
    %v1459 = vmax.f32 %v1456, 0.0
    %v1460 = vld [vmem:[#allocation7] sm:$0xff]
    %v1461 = vld [vmem:[#allocation7 + $0x8] sm:$0xff]
    %v1462 = vld [vmem:[#allocation7 + $0x10] sm:$0xff]
    %v1463 = vld [vmem:[#allocation7 + $0x18] sm:$0xff]
    %v1464 = vld [vmem:[#allocation7 + $0x20] sm:$0xff]
    %v1465 = vld [vmem:[#allocation7 + $0x28] sm:$0xff]
    %v1466 = vld [vmem:[#allocation7 + $0x30] sm:$0xff]
    %v1467 = vld [vmem:[#allocation7 + $0x38] sm:$0xff]
    %v1468 = vld [vmem:[#allocation7 + $0x40] sm:$0xff]
    %v1469 = vld [vmem:[#allocation7 + $0x48] sm:$0xff]
    %v1470 = vld [vmem:[#allocation7 + $0x50] sm:$0xff]
    %v1471 = vld [vmem:[#allocation7 + $0x58] sm:$0xff]
    %v1472 = vld [vmem:[#allocation7 + $0x60] sm:$0xff]
    %v1473 = vld [vmem:[#allocation7 + $0x68] sm:$0xff]
    %v1474 = vld [vmem:[#allocation7 + $0x70] sm:$0xff]
    %v1475 = vld [vmem:[#allocation7 + $0x78] sm:$0xff]
    %v1476 = vld [vmem:[#allocation8] sm:$0x1]
    %v1478 = vlaneseq
    %v1479 = vshrl.u32 %v1478, 7
    %v1480 = vsub.s32 0, %v1479
    %v1481 = vrot.slane %v1476, %v1480
    %1483 = vmatprep.subr.mxu0 0.0
    %1484 = vmatpush1.msra.mxu0 %v1460
    %1485 = vmatprep.subr.mxu0 0.0
    %1486 = vmatpush1.msra.mxu0 %v1461
    %1487 = vmatprep.subr.mxu0 0.0
    %1488 = vmatpush1.msra.mxu0 %v1462
    %1489 = vmatprep.subr.mxu0 0.0
    %1490 = vmatpush1.msra.mxu0 %v1463
    %1491 = vmatprep.subr.mxu0 0.0
    %1492 = vmatpush1.msra.mxu0 %v1464
    %1493 = vmatprep.subr.mxu0 0.0
    %1494 = vmatpush1.msra.mxu0 %v1465
    %1495 = vmatprep.subr.mxu0 0.0
    %1496 = vmatpush1.msra.mxu0 %v1466
    %1497 = vmatprep.subr.mxu0 0.0
    %1498 = vmatpush1.msra.mxu0 %v1467
    %1499 = vmatprep.subr.mxu0 0.0
    %1500 = vmatpush1.msra.mxu0 %v1468
    %1501 = vmatprep.subr.mxu0 0.0
    %1502 = vmatpush1.msra.mxu0 %v1469
    %1503 = vmatprep.subr.mxu0 0.0
    %1504 = vmatpush1.msra.mxu0 %v1470
    %1505 = vmatprep.subr.mxu0 0.0
    %1506 = vmatpush1.msra.mxu0 %v1471
    %1507 = vmatprep.subr.mxu0 0.0
    %1508 = vmatpush1.msra.mxu0 %v1472
    %1509 = vmatprep.subr.mxu0 0.0
    %1510 = vmatpush1.msra.mxu0 %v1473
    %1511 = vmatprep.subr.mxu0 0.0
    %1512 = vmatpush1.msra.mxu0 %v1474
    %1513 = vmatprep.subr.mxu0 0.0
    %1514 = vmatpush1.msra.mxu0 %v1475
    %1515 = vmatprep.subr.mxu0 0.0
    %1516 = vmatpush1.msra.mxu0 0.0
    %1517 = vmatprep.subr.mxu0 0.0
    %1518 = vmatpush1.msra.mxu0 0.0
    %1519 = vmatprep.subr.mxu0 0.0
    %1520 = vmatpush1.msra.mxu0 0.0
    %1521 = vmatprep.subr.mxu0 0.0
    %1522 = vmatpush1.msra.mxu0 0.0
    %1523 = vmatprep.subr.mxu0 0.0
    %1524 = vmatpush1.msra.mxu0 0.0
    %1525 = vmatprep.subr.mxu0 0.0
    %1526 = vmatpush1.msra.mxu0 0.0
    %1527 = vmatprep.subr.mxu0 0.0
    %1528 = vmatpush1.msra.mxu0 0.0
    %1529 = vmatprep.subr.mxu0 0.0
    %1530 = vmatpush1.msra.mxu0 0.0
    %1531 = vmatprep.subr.mxu0 0.0
    %1532 = vmatpush1.msra.mxu0 0.0
    %1533 = vmatprep.subr.mxu0 0.0
    %1534 = vmatpush1.msra.mxu0 0.0
    %1535 = vmatprep.subr.mxu0 0.0
    %1536 = vmatpush1.msra.mxu0 0.0
    %1537 = vmatprep.subr.mxu0 0.0
    %1538 = vmatpush1.msra.mxu0 0.0
    %1539 = vmatprep.subr.mxu0 0.0
    %1540 = vmatpush1.msra.mxu0 0.0
    %1541 = vmatprep.subr.mxu0 0.0
    %1542 = vmatpush1.msra.mxu0 0.0
    %1543 = vmatprep.subr.mxu0 0.0
    %1544 = vmatpush1.msra.mxu0 0.0
    %1545 = vmatprep.subr.mxu0 0.0
    %1546 = vmatpush1.msra.mxu0 0.0
    %1547 = vmatprep.mubr.f32.mxu0 0.0
    %1548 = vmatmul.mubr.f32.gmra.mrb[0].mxu0 %v1459
    %v1549 = vpop.f32.mrb[0].mxu0
    %v1550 = vadd.f32 %v1481, %v1549
    %v1551 = vpop.f32.mrb[0].mxu0
    %1552 = vdwg.mxu0
    %v1553 = vmax.f32 %v1550, 0.0
    %v1554 = vld [vmem:[%s5] sm:$0xff]
    %v1555 = vld [vmem:[%s5 + $0x8] sm:$0xff]
    %v1556 = vld [vmem:[%s5 + $0x10] sm:$0xff]
    %v1557 = vld [vmem:[%s5 + $0x18] sm:$0xff]
    %v1558 = vld [vmem:[%s5 + $0x20] sm:$0xff]
    %v1559 = vld [vmem:[%s5 + $0x28] sm:$0xff]
    %v1560 = vld [vmem:[%s5 + $0x30] sm:$0xff]
    %v1561 = vld [vmem:[%s5 + $0x38] sm:$0xff]
    %v1562 = vld [vmem:[%s5 + $0x40] sm:$0xff]
    %v1563 = vld [vmem:[%s5 + $0x48] sm:$0xff]
    %v1564 = vld [vmem:[%s5 + $0x50] sm:$0xff]
    %v1565 = vld [vmem:[%s5 + $0x58] sm:$0xff]
    %v1566 = vld [vmem:[%s5 + $0x60] sm:$0xff]
    %v1567 = vld [vmem:[%s5 + $0x68] sm:$0xff]
    %v1568 = vld [vmem:[%s5 + $0x70] sm:$0xff]
    %v1569 = vld [vmem:[%s5 + $0x78] sm:$0xff]
    %v1570 = vld [vmem:[%s6] sm:$0x1]
    %v1572 = vlaneseq
    %v1573 = vshrl.u32 %v1572, 7
    %v1574 = vsub.s32 0, %v1573
    %v1575 = vrot.slane %v1570, %v1574
    %1577 = vmatprep.subr.mxu0 0.0
    %1578 = vmatpush1.msra.mxu0 %v1554
    %1579 = vmatprep.subr.mxu0 0.0
    %1580 = vmatpush1.msra.mxu0 %v1555
    %1581 = vmatprep.subr.mxu0 0.0
    %1582 = vmatpush1.msra.mxu0 %v1556
    %1583 = vmatprep.subr.mxu0 0.0
    %1584 = vmatpush1.msra.mxu0 %v1557
    %1585 = vmatprep.subr.mxu0 0.0
    %1586 = vmatpush1.msra.mxu0 %v1558
    %1587 = vmatprep.subr.mxu0 0.0
    %1588 = vmatpush1.msra.mxu0 %v1559
    %1589 = vmatprep.subr.mxu0 0.0
    %1590 = vmatpush1.msra.mxu0 %v1560
    %1591 = vmatprep.subr.mxu0 0.0
    %1592 = vmatpush1.msra.mxu0 %v1561
    %1593 = vmatprep.subr.mxu0 0.0
    %1594 = vmatpush1.msra.mxu0 %v1562
    %1595 = vmatprep.subr.mxu0 0.0
    %1596 = vmatpush1.msra.mxu0 %v1563
    %1597 = vmatprep.subr.mxu0 0.0
    %1598 = vmatpush1.msra.mxu0 %v1564
    %1599 = vmatprep.subr.mxu0 0.0
    %1600 = vmatpush1.msra.mxu0 %v1565
    %1601 = vmatprep.subr.mxu0 0.0
    %1602 = vmatpush1.msra.mxu0 %v1566
    %1603 = vmatprep.subr.mxu0 0.0
    %1604 = vmatpush1.msra.mxu0 %v1567
    %1605 = vmatprep.subr.mxu0 0.0
    %1606 = vmatpush1.msra.mxu0 %v1568
    %1607 = vmatprep.subr.mxu0 0.0
    %1608 = vmatpush1.msra.mxu0 %v1569
    %1609 = vmatprep.subr.mxu0 0.0
    %1610 = vmatpush1.msra.mxu0 0.0
    %1611 = vmatprep.subr.mxu0 0.0
    %1612 = vmatpush1.msra.mxu0 0.0
    %1613 = vmatprep.subr.mxu0 0.0
    %1614 = vmatpush1.msra.mxu0 0.0
    %1615 = vmatprep.subr.mxu0 0.0
    %1616 = vmatpush1.msra.mxu0 0.0
    %1617 = vmatprep.subr.mxu0 0.0
    %1618 = vmatpush1.msra.mxu0 0.0
    %1619 = vmatprep.subr.mxu0 0.0
    %1620 = vmatpush1.msra.mxu0 0.0
    %1621 = vmatprep.subr.mxu0 0.0
    %1622 = vmatpush1.msra.mxu0 0.0
    %1623 = vmatprep.subr.mxu0 0.0
    %1624 = vmatpush1.msra.mxu0 0.0
    %1625 = vmatprep.subr.mxu0 0.0
    %1626 = vmatpush1.msra.mxu0 0.0
    %1627 = vmatprep.subr.mxu0 0.0
    %1628 = vmatpush1.msra.mxu0 0.0
    %1629 = vmatprep.subr.mxu0 0.0
    %1630 = vmatpush1.msra.mxu0 0.0
    %1631 = vmatprep.subr.mxu0 0.0
    %1632 = vmatpush1.msra.mxu0 0.0
    %1633 = vmatprep.subr.mxu0 0.0
    %1634 = vmatpush1.msra.mxu0 0.0
    %1635 = vmatprep.subr.mxu0 0.0
    %1636 = vmatpush1.msra.mxu0 0.0
    %1637 = vmatprep.subr.mxu0 0.0
    %1638 = vmatpush1.msra.mxu0 0.0
    %1639 = vmatprep.subr.mxu0 0.0
    %1640 = vmatpush1.msra.mxu0 0.0
    %1641 = vmatprep.mubr.f32.mxu0 0.0
    %1642 = vmatmul.mubr.f32.gmra.mrb[0].mxu0 %v1553
    %v1643 = vpop.f32.mrb[0].mxu0
    %v1644 = vadd.f32 %v1575, %v1643
    %v1645 = vpop.f32.mrb[0].mxu0
    %1646 = vdwg.mxu0
    %v1647 = vmax.f32 %v1644, 0.0
    %v1648 = vld [vmem:[%s7] sm:$0xff]
    %v1649 = vld [vmem:[%s7 + $0x8] sm:$0xff]
    %v1650 = vld [vmem:[%s7 + $0x10] sm:$0xff]
    %v1651 = vld [vmem:[%s7 + $0x18] sm:$0xff]
    %v1652 = vld [vmem:[%s7 + $0x20] sm:$0xff]
    %v1653 = vld [vmem:[%s7 + $0x28] sm:$0xff]
    %v1654 = vld [vmem:[%s7 + $0x30] sm:$0xff]
    %v1655 = vld [vmem:[%s7 + $0x38] sm:$0xff]
    %v1656 = vld [vmem:[%s7 + $0x40] sm:$0xff]
    %v1657 = vld [vmem:[%s7 + $0x48] sm:$0xff]
    %v1658 = vld [vmem:[%s7 + $0x50] sm:$0xff]
    %v1659 = vld [vmem:[%s7 + $0x58] sm:$0xff]
    %v1660 = vld [vmem:[%s7 + $0x60] sm:$0xff]
    %v1661 = vld [vmem:[%s7 + $0x68] sm:$0xff]
    %v1662 = vld [vmem:[%s7 + $0x70] sm:$0xff]
    %v1663 = vld [vmem:[%s7 + $0x78] sm:$0xff]
    %v1664 = vld [vmem:[%s8] sm:$0x1]
    %v1666 = vlaneseq
    %v1667 = vshrl.u32 %v1666, 7
    %v1668 = vsub.s32 0, %v1667
    %v1669 = vrot.slane %v1664, %v1668
    %1671 = vmatprep.subr.mxu0 0.0
    %1672 = vmatpush1.msra.mxu0 %v1648
    %1673 = vmatprep.subr.mxu0 0.0
    %1674 = vmatpush1.msra.mxu0 %v1649
    %1675 = vmatprep.subr.mxu0 0.0
    %1676 = vmatpush1.msra.mxu0 %v1650
    %1677 = vmatprep.subr.mxu0 0.0
    %1678 = vmatpush1.msra.mxu0 %v1651
    %1679 = vmatprep.subr.mxu0 0.0
    %1680 = vmatpush1.msra.mxu0 %v1652
    %1681 = vmatprep.subr.mxu0 0.0
    %1682 = vmatpush1.msra.mxu0 %v1653
    %1683 = vmatprep.subr.mxu0 0.0
    %1684 = vmatpush1.msra.mxu0 %v1654
    %1685 = vmatprep.subr.mxu0 0.0
    %1686 = vmatpush1.msra.mxu0 %v1655
    %1687 = vmatprep.subr.mxu0 0.0
    %1688 = vmatpush1.msra.mxu0 %v1656
    %1689 = vmatprep.subr.mxu0 0.0
    %1690 = vmatpush1.msra.mxu0 %v1657
    %1691 = vmatprep.subr.mxu0 0.0
    %1692 = vmatpush1.msra.mxu0 %v1658
    %1693 = vmatprep.subr.mxu0 0.0
    %1694 = vmatpush1.msra.mxu0 %v1659
    %1695 = vmatprep.subr.mxu0 0.0
    %1696 = vmatpush1.msra.mxu0 %v1660
    %1697 = vmatprep.subr.mxu0 0.0
    %1698 = vmatpush1.msra.mxu0 %v1661
    %1699 = vmatprep.subr.mxu0 0.0
    %1700 = vmatpush1.msra.mxu0 %v1662
    %1701 = vmatprep.subr.mxu0 0.0
    %1702 = vmatpush1.msra.mxu0 %v1663
    %1703 = vmatprep.subr.mxu0 0.0
    %1704 = vmatpush1.msra.mxu0 0.0
    %1705 = vmatprep.subr.mxu0 0.0
    %1706 = vmatpush1.msra.mxu0 0.0
    %1707 = vmatprep.subr.mxu0 0.0
    %1708 = vmatpush1.msra.mxu0 0.0
    %1709 = vmatprep.subr.mxu0 0.0
    %1710 = vmatpush1.msra.mxu0 0.0
    %1711 = vmatprep.subr.mxu0 0.0
    %1712 = vmatpush1.msra.mxu0 0.0
    %1713 = vmatprep.subr.mxu0 0.0
    %1714 = vmatpush1.msra.mxu0 0.0
    %1715 = vmatprep.subr.mxu0 0.0
    %1716 = vmatpush1.msra.mxu0 0.0
    %1717 = vmatprep.subr.mxu0 0.0
    %1718 = vmatpush1.msra.mxu0 0.0
    %1719 = vmatprep.subr.mxu0 0.0
    %1720 = vmatpush1.msra.mxu0 0.0
    %1721 = vmatprep.subr.mxu0 0.0
    %1722 = vmatpush1.msra.mxu0 0.0
    %1723 = vmatprep.subr.mxu0 0.0
    %1724 = vmatpush1.msra.mxu0 0.0
    %1725 = vmatprep.subr.mxu0 0.0
    %1726 = vmatpush1.msra.mxu0 0.0
    %1727 = vmatprep.subr.mxu0 0.0
    %1728 = vmatpush1.msra.mxu0 0.0
    %1729 = vmatprep.subr.mxu0 0.0
    %1730 = vmatpush1.msra.mxu0 0.0
    %1731 = vmatprep.subr.mxu0 0.0
    %1732 = vmatpush1.msra.mxu0 0.0
    %1733 = vmatprep.subr.mxu0 0.0
    %1734 = vmatpush1.msra.mxu0 0.0
    %1735 = vmatprep.mubr.f32.mxu0 0.0
    %1736 = vmatmul.mubr.f32.gmra.mrb[0].mxu0 %v1647
    %v1737 = vpop.f32.mrb[0].mxu0
    %v1738 = vadd.f32 %v1669, %v1737
    %v1739 = vpop.f32.mrb[0].mxu0
    %1740 = vdwg.mxu0
    %v1741 = vmax.f32 %v1738, 0.0
    %v1742 = vld [vmem:[%s9] sm:$0xff]
    %v1743 = vld [vmem:[%s9 + $0x8] sm:$0xff]
    %v1744 = vld [vmem:[%s9 + $0x10] sm:$0xff]
    %v1745 = vld [vmem:[%s9 + $0x18] sm:$0xff]
    %v1746 = vld [vmem:[%s9 + $0x20] sm:$0xff]
    %v1747 = vld [vmem:[%s9 + $0x28] sm:$0xff]
    %v1748 = vld [vmem:[%s9 + $0x30] sm:$0xff]
    %v1749 = vld [vmem:[%s9 + $0x38] sm:$0xff]
    %v1750 = vld [vmem:[%s9 + $0x40] sm:$0xff]
    %v1751 = vld [vmem:[%s9 + $0x48] sm:$0xff]
    %v1752 = vld [vmem:[%s9 + $0x50] sm:$0xff]
    %v1753 = vld [vmem:[%s9 + $0x58] sm:$0xff]
    %v1754 = vld [vmem:[%s9 + $0x60] sm:$0xff]
    %v1755 = vld [vmem:[%s9 + $0x68] sm:$0xff]
    %v1756 = vld [vmem:[%s9 + $0x70] sm:$0xff]
    %v1757 = vld [vmem:[%s9 + $0x78] sm:$0xff]
    %v1758 = vld [vmem:[%s10] sm:$0x1]
    %v1760 = vlaneseq
    %v1761 = vshrl.u32 %v1760, 7
    %v1762 = vsub.s32 0, %v1761
    %v1763 = vrot.slane %v1758, %v1762
    %1765 = vmatprep.subr.mxu0 0.0
    %1766 = vmatpush1.msra.mxu0 %v1742
    %1767 = vmatprep.subr.mxu0 0.0
    %1768 = vmatpush1.msra.mxu0 %v1743
    %1769 = vmatprep.subr.mxu0 0.0
    %1770 = vmatpush1.msra.mxu0 %v1744
    %1771 = vmatprep.subr.mxu0 0.0
    %1772 = vmatpush1.msra.mxu0 %v1745
    %1773 = vmatprep.subr.mxu0 0.0
    %1774 = vmatpush1.msra.mxu0 %v1746
    %1775 = vmatprep.subr.mxu0 0.0
    %1776 = vmatpush1.msra.mxu0 %v1747
    %1777 = vmatprep.subr.mxu0 0.0
    %1778 = vmatpush1.msra.mxu0 %v1748
    %1779 = vmatprep.subr.mxu0 0.0
    %1780 = vmatpush1.msra.mxu0 %v1749
    %1781 = vmatprep.subr.mxu0 0.0
    %1782 = vmatpush1.msra.mxu0 %v1750
    %1783 = vmatprep.subr.mxu0 0.0
    %1784 = vmatpush1.msra.mxu0 %v1751
    %1785 = vmatprep.subr.mxu0 0.0
    %1786 = vmatpush1.msra.mxu0 %v1752
    %1787 = vmatprep.subr.mxu0 0.0
    %1788 = vmatpush1.msra.mxu0 %v1753
    %1789 = vmatprep.subr.mxu0 0.0
    %1790 = vmatpush1.msra.mxu0 %v1754
    %1791 = vmatprep.subr.mxu0 0.0
    %1792 = vmatpush1.msra.mxu0 %v1755
    %1793 = vmatprep.subr.mxu0 0.0
    %1794 = vmatpush1.msra.mxu0 %v1756
    %1795 = vmatprep.subr.mxu0 0.0
    %1796 = vmatpush1.msra.mxu0 %v1757
    %1797 = vmatprep.subr.mxu0 0.0
    %1798 = vmatpush1.msra.mxu0 0.0
    %1799 = vmatprep.subr.mxu0 0.0
    %1800 = vmatpush1.msra.mxu0 0.0
    %1801 = vmatprep.subr.mxu0 0.0
    %1802 = vmatpush1.msra.mxu0 0.0
    %1803 = vmatprep.subr.mxu0 0.0
    %1804 = vmatpush1.msra.mxu0 0.0
    %1805 = vmatprep.subr.mxu0 0.0
    %1806 = vmatpush1.msra.mxu0 0.0
    %1807 = vmatprep.subr.mxu0 0.0
    %1808 = vmatpush1.msra.mxu0 0.0
    %1809 = vmatprep.subr.mxu0 0.0
    %1810 = vmatpush1.msra.mxu0 0.0
    %1811 = vmatprep.subr.mxu0 0.0
    %1812 = vmatpush1.msra.mxu0 0.0
    %1813 = vmatprep.subr.mxu0 0.0
    %1814 = vmatpush1.msra.mxu0 0.0
    %1815 = vmatprep.subr.mxu0 0.0
    %1816 = vmatpush1.msra.mxu0 0.0
    %1817 = vmatprep.subr.mxu0 0.0
    %1818 = vmatpush1.msra.mxu0 0.0
    %1819 = vmatprep.subr.mxu0 0.0
    %1820 = vmatpush1.msra.mxu0 0.0
    %1821 = vmatprep.subr.mxu0 0.0
    %1822 = vmatpush1.msra.mxu0 0.0
    %1823 = vmatprep.subr.mxu0 0.0
    %1824 = vmatpush1.msra.mxu0 0.0
    %1825 = vmatprep.subr.mxu0 0.0
    %1826 = vmatpush1.msra.mxu0 0.0
    %1827 = vmatprep.subr.mxu0 0.0
    %1828 = vmatpush1.msra.mxu0 0.0
    %1829 = vmatprep.mubr.f32.mxu0 0.0
    %1830 = vmatmul.mubr.f32.gmra.mrb[0].mxu0 %v1741
    %v1831 = vpop.f32.mrb[0].mxu0
    %v1832 = vadd.f32 %v1763, %v1831
    %v1833 = vpop.f32.mrb[0].mxu0
    %1834 = vdwg.mxu0
    %1835 = vst [vmem:[#allocation10] sm:$0x3] %v1832
    // Predicated region
    $region62: #{mlp3_forward.1} parent=1 // pred_check
      _
    $region63: #{mlp3_forward.1} parent=1 // pred_check_branch
      %1837 = sbr.rel (0) target = $region65
    $region64: #{mlp3_forward.1} parent=1 // pred_region
      %s1839 = ssub.s32 32, 32
      %1840 = vsyncadd [#allocation4], %s1839
      %s1842 = sshll.u32 [#allocation10], 4
      %s1843 = int_to_ptr.vmem [resolvable:$true] %s1842
      %1845 = dma.vmem_to_hbm [thread:$0]  %s1843, 32, %s11, [#allocation4]
    $region65: #{mlp3_forward.1} parent=1 // pred_fallthru
      _
    // Predicated region
    $region66: #{mlp3_forward.1} parent=1 // pred_check
      _
    $region67: #{mlp3_forward.1} parent=1 // pred_check_branch
      %1847 = sbr.rel (0) target = $region69
    $region68: #{mlp3_forward.1} parent=1 // pred_region
      %1848 = dma.done [#allocation4], 32
    $region69: #{mlp3_forward.1} parent=1 // pred_fallthru
      _
    %1849 = vsyncpa [#allocation3], 1
    %1850 = vsyncpa [#allocation6], 1
    %1851 = vsyncpa [#allocation9], 1
    %1852 = vsyncpa [#allocation4], 1

</llo_original>
